<compile_context>
chip_gen: v7x
topology: tpu7x:2x2x1
jax: 0.10.0
libtpu: 0.0.40
codegen_flags: <defaults>
</compile_context>

<pallas_src>
import math
import jax
import jax.numpy as jnp
from jax import lax
from jax.experimental import pallas as pl
from jax.experimental.pallas import tpu as pltpu

# Hyperparameters (match the nn.Module defaults)
D_MODEL = 32
N_HEADS = 8
E_LAYERS = 3
D_FF = 512
LN_EPS = 1e-5
TILE_B = 512          # batch rows per grid step (well within scoped VMEM on v5e/v6e/v7x)


def _round_up(n, m):
    return ((n + m - 1) // m) * m


# ----------------------------- in-kernel helpers -----------------------------
def _gelu(x):
    # TODO(synk): exact-erf GELU has no guaranteed Mosaic lowering; tanh-approx GELU is used
    # (single EUP transcendental, |delta| vs exact erf ~1e-3), gated by the reference check below.
    c = math.sqrt(2.0 / math.pi)
    return 0.5 * x * (1.0 + jnp.tanh(c * (x + 0.044715 * x * x * x)))


def _layer_norm(x, gamma, beta):
    mean = jnp.mean(x, axis=-1, keepdims=True)
    var = jnp.mean((x - mean) ** 2, axis=-1, keepdims=True)
    return (x - mean) * lax.rsqrt(var + LN_EPS) * gamma + beta


# --------------------------------- the kernel ---------------------------------
def transformer_kernel(
    x_ref,                                   # (TB, C)    f32 input rows (one token per batch row)
    wt_ref, pe_ref,                          # (C, D) bf16 folded conv taps, (1, D) f32 pos. emb.
    wv_ref, wo_ref,                          # (E, D, D)  bf16 (pre-transposed: y = x @ W)
    bv_ref, bo_ref,                          # (E, D)     f32
    wc1_ref, bc1_ref,                        # (E, D, F)  bf16, (E, F) f32
    wc2_ref, bc2_ref,                        # (E, F, D)  bf16, (E, D) f32
    g1_ref, b1_ref, g2_ref, b2_ref,          # (E, D)     f32 LayerNorm params
    gf_ref, bf_ref,                          # (1, D)     f32 final LayerNorm
    wp_ref, bp_ref,                          # (D, c_out) bf16, (1, c_out) f32
    out_ref,                                 # (TB, c_out) f32
):
    f32 = jnp.float32
    bf16 = jnp.bfloat16

    # --- DataEmbedding: folded circular k=3 conv (all taps identical at L=1) + positional emb ---
    x = jnp.dot(x_ref[...].astype(bf16), wt_ref[...], preferred_element_type=f32) + pe_ref[...]

    # --- Encoder: E_LAYERS x (self-attention + FFN) ---
    for l in range(E_LAYERS):
        # Attention over a single key: softmax == 1 exactly, so out == value projection.
        v = jnp.dot(x.astype(bf16), wv_ref[l], preferred_element_type=f32) + bv_ref[pl.ds(l, 1), :]
        new_x = jnp.dot(v.astype(bf16), wo_ref[l], preferred_element_type=f32) + bo_ref[pl.ds(l, 1), :]
        x = _layer_norm(x + new_x, g1_ref[pl.ds(l, 1), :], b1_ref[pl.ds(l, 1), :])        # norm1

        # FFN: 1x1 conv -> gelu -> 1x1 conv, residual, norm2 (dropout = 0).
        y = _gelu(jnp.dot(x.astype(bf16), wc1_ref[l], preferred_element_type=f32)
                  + bc1_ref[pl.ds(l, 1), :])
        y = jnp.dot(y.astype(bf16), wc2_ref[l], preferred_element_type=f32) + bc2_ref[pl.ds(l, 1), :]
        x = _layer_norm(x + y, g2_ref[pl.ds(l, 1), :], b2_ref[pl.ds(l, 1), :])            # norm2

    x = _layer_norm(x, gf_ref[...], bf_ref[...])                                           # final norm
    out_ref[...] = (jnp.dot(x.astype(bf16), wp_ref[...], preferred_element_type=f32)
                    + bp_ref[...]).astype(out_ref.dtype)


# --------------------------------- host-side glue ---------------------------------
def positional_embedding(seq_len, d_model):
    pos = jnp.arange(seq_len, dtype=jnp.float32)[:, None]
    div = jnp.exp(jnp.arange(0, d_model, 2, dtype=jnp.float32)
                  * (-math.log(10000.0) / d_model))
    pe = jnp.zeros((seq_len, d_model), jnp.float32)
    pe = pe.at[:, 0::2].set(jnp.sin(pos * div))
    pe = pe.at[:, 1::2].set(jnp.cos(pos * div))
    return pe


def init_params(key, enc_in, c_out):
    keys = jax.random.split(key, 15)

    def rnd(k, shape, scale=0.02):
        return scale * jax.random.normal(k, shape, dtype=jnp.float32)

    p = {}
    # TokenEmbedding Conv1d(enc_in, d_model, k=3, circular, bias=False) - torch (out, in, k)
    p["tok_w"] = rnd(keys[0], (D_MODEL, enc_in, 3))
    # AttentionLayer projections - torch Linear (out, in) + bias.
    # (wq/wk/bq/bk exist in the module but cannot affect the output when L == 1; kept for the reference.)
    p["wq"] = rnd(keys[1], (E_LAYERS, D_MODEL, D_MODEL))
    p["wk"] = rnd(keys[2], (E_LAYERS, D_MODEL, D_MODEL))
    p["wv"] = rnd(keys[3], (E_LAYERS, D_MODEL, D_MODEL))
    p["wo"] = rnd(keys[4], (E_LAYERS, D_MODEL, D_MODEL))
    p["bq"] = rnd(keys[5], (E_LAYERS, D_MODEL))
    p["bk"] = rnd(keys[6], (E_LAYERS, D_MODEL))
    p["bv"] = rnd(keys[7], (E_LAYERS, D_MODEL))
    p["bo"] = rnd(keys[8], (E_LAYERS, D_MODEL))
    # FFN: Conv1d(d_model, d_ff, 1) / Conv1d(d_ff, d_model, 1), both with bias
    p["wc1"] = rnd(keys[9], (E_LAYERS, D_FF, D_MODEL))
    p["bc1"] = rnd(keys[10], (E_LAYERS, D_FF))
    p["wc2"] = rnd(keys[11], (E_LAYERS, D_MODEL, D_FF))
    p["bc2"] = rnd(keys[12], (E_LAYERS, D_MODEL))
    # LayerNorms (weight=1, bias=0, like fresh nn.LayerNorm)
    p["g1"] = jnp.ones((E_LAYERS, D_MODEL), jnp.float32)
    p["b1"] = jnp.zeros((E_LAYERS, D_MODEL), jnp.float32)
    p["g2"] = jnp.ones((E_LAYERS, D_MODEL), jnp.float32)
    p["b2"] = jnp.zeros((E_LAYERS, D_MODEL), jnp.float32)
    p["gf"] = jnp.ones((1, D_MODEL), jnp.float32)
    p["bf"] = jnp.zeros((1, D_MODEL), jnp.float32)
    # projection Linear(d_model, c_out, bias=True) - torch (out, in)
    p["wp"] = rnd(keys[13], (c_out, D_MODEL))
    p["bp"] = rnd(keys[14], (1, c_out))
    return p


def transformer_forward(x_enc, params, tile_b=TILE_B):
    B, C = x_enc.shape
    c_out = params["wp"].shape[0]
    bf16 = jnp.bfloat16

    # Fold the circular k=3 conv taps (roll on a length-1 sequence is the identity).
    wt = (params["tok_w"][:, :, 0] + params["tok_w"][:, :, 1] + params["tok_w"][:, :, 2]).T
    pe = positional_embedding(1, D_MODEL)                      # (1, D)

    # Pre-transpose torch (out, in) weights so the kernel computes y = x @ W + b; cast matmul
    # operands to bf16 (f32 accumulation in the kernel).
    wt = wt.astype(bf16)
    wv = jnp.swapaxes(params["wv"], 1, 2).astype(bf16)
    wo = jnp.swapaxes(params["wo"], 1, 2).astype(bf16)
    wc1 = jnp.swapaxes(params["wc1"], 1, 2).astype(bf16)
    wc2 = jnp.swapaxes(params["wc2"], 1, 2).astype(bf16)
    wp = params["wp"].T.astype(bf16)

    # Batch tiling: pad B up to a multiple of the block size (padded rows are sliced off below).
    tb = min(tile_b, _round_up(B, 8))
    Bp = _round_up(B, tb)
    x = x_enc.astype(jnp.float32)
    if Bp != B:
        x = jnp.pad(x, ((0, Bp - B), (0, 0)))

    inputs = [
        x, wt, pe,
        wv, wo, params["bv"], params["bo"],
        wc1, params["bc1"], wc2, params["bc2"],
        params["g1"], params["b1"], params["g2"], params["b2"],
        params["gf"], params["bf"],
        wp, params["bp"],
    ]

    def full_spec(a):
        nd = a.ndim
        return pl.BlockSpec(a.shape, lambda i, nd=nd: (0,) * nd)

    in_specs = [pl.BlockSpec((tb, C), lambda i: (i, 0))] + [full_spec(a) for a in inputs[1:]]
    out_spec = pl.BlockSpec((tb, c_out), lambda i: (i, 0))

    dec = pl.pallas_call(
        transformer_kernel,
        out_shape=jax.ShapeDtypeStruct((Bp, c_out), jnp.float32),
        grid_spec=pltpu.PrefetchScalarGridSpec(
            num_scalar_prefetch=0,
            grid=(Bp // tb,),
            in_specs=in_specs,
            out_specs=out_spec,
        ),
        # Independent batch blocks -> "parallel" (sharded across both TCs on v7x).
        # VMEM per block (TB=512): ~1.5 MiB activations + ~0.3 MiB weights, well under every
        # generation's default scoped VMEM, so no vmem_limit_bytes override is needed.
        compiler_params=pltpu.CompilerParams(dimension_semantics=("parallel",)),
    )(*inputs)

    # PyTorch: dec_out.permute(0, 2, 1).squeeze(-1) with L == 1  ==  (B, c_out)
    return dec[:B]


# ------------------------- pure-JAX f32 reference (full semantics) -------------------------
def _ln_ref(x, g, b):
    m = jnp.mean(x, axis=-1, keepdims=True)
    v = jnp.mean((x - m) ** 2, axis=-1, keepdims=True)
    return (x - m) / jnp.sqrt(v + LN_EPS) * g + b


def transformer_reference(x_enc, params):
    x3 = x_enc[:, None, :].astype(jnp.float32)                 # (B, L=1, C)
    B, L, C = x3.shape
    xm1 = jnp.roll(x3, 1, axis=1)
    xp1 = jnp.roll(x3, -1, axis=1)
    w = params["tok_w"]
    tok = (xm1 @ w[:, :, 0].T + x3 @ w[:, :, 1].T + xp1 @ w[:, :, 2].T)
    x = tok + positional_embedding(L, D_MODEL)[None]
    dh = D_MODEL // N_HEADS
    for l in range(E_LAYERS):
        q = x @ params["wq"][l].T + params["bq"][l]
        k = x @ params["wk"][l].T + params["bk"][l]
        v = x @ params["wv"][l].T + params["bv"][l]
        qh = q.reshape(B, L, N_HEADS, dh)
        kh = k.reshape(B, L, N_HEADS, dh)
        vh = v.reshape(B, L, N_HEADS, dh)
        scores = jnp.einsum("blhe,bshe->bhls", qh, kh) / math.sqrt(dh)
        A = jax.nn.softmax(scores, axis=-1)
        o = jnp.einsum("bhls,bshd->blhd", A, vh).reshape(B, L, D_MODEL)
        new_x = o @ params["wo"][l].T + params["bo"][l]
        x = _ln_ref(x + new_x, params["g1"][l], params["b1"][l])
        y = jax.nn.gelu(x @ params["wc1"][l].T + params["bc1"][l], approximate=False)
        y = y @ params["wc2"][l].T + params["bc2"][l]
        x = _ln_ref(x + y, params["g2"][l], params["b2"][l])
    x = _ln_ref(x, params["gf"][0], params["bf"][0])
    dec = x @ params["wp"].T + params["bp"][0]                 # (B, L, c_out)
    out = jnp.transpose(dec, (0, 2, 1))
    if out.shape[-1] == 1:
        out = out[..., 0]
    return out


if __name__ == "__main__":
    key = jax.random.PRNGKey(0)
    k_x, k_p = jax.random.split(key)

    B, enc_in, c_out = 2, 16, 16
    x_enc = jax.random.normal(k_x, (B, enc_in), dtype=jnp.float32)
    params = init_params(k_p, enc_in, c_out)

    out = jax.block_until_ready(transformer_forward(x_enc, params))
    ref = jax.block_until_ready(transformer_reference(x_enc, params))

    assert out.shape == (B, c_out), out.shape
    assert bool(jnp.all(jnp.isfinite(out)))
    max_err = float(jnp.max(jnp.abs(out - ref)))
    assert max_err < 2e-2, f"kernel deviates from f32 reference: max abs err = {max_err}"
    print("KERNEL_OK")
</pallas_src>

<mosaic_0001>
module attributes {stable_mosaic.version = 11 : i64} {
  func.func @transformer_kernel(%arg0: i32, %arg1: memref<8x16xf32, #tpu.memory_space<vmem>>, %arg2: memref<16x32xbf16, #tpu.memory_space<vmem>>, %arg3: memref<1x32xf32, #tpu.memory_space<vmem>>, %arg4: memref<3x32x32xbf16, #tpu.memory_space<vmem>>, %arg5: memref<3x32x32xbf16, #tpu.memory_space<vmem>>, %arg6: memref<3x32xf32, #tpu.memory_space<vmem>>, %arg7: memref<3x32xf32, #tpu.memory_space<vmem>>, %arg8: memref<3x32x512xbf16, #tpu.memory_space<vmem>>, %arg9: memref<3x512xf32, #tpu.memory_space<vmem>>, %arg10: memref<3x512x32xbf16, #tpu.memory_space<vmem>>, %arg11: memref<3x32xf32, #tpu.memory_space<vmem>>, %arg12: memref<3x32xf32, #tpu.memory_space<vmem>>, %arg13: memref<3x32xf32, #tpu.memory_space<vmem>>, %arg14: memref<3x32xf32, #tpu.memory_space<vmem>>, %arg15: memref<3x32xf32, #tpu.memory_space<vmem>>, %arg16: memref<1x32xf32, #tpu.memory_space<vmem>>, %arg17: memref<1x32xf32, #tpu.memory_space<vmem>>, %arg18: memref<32x16xbf16, #tpu.memory_space<vmem>>, %arg19: memref<1x16xf32, #tpu.memory_space<vmem>>, %arg20: memref<8x16xf32, #tpu.memory_space<vmem>>) attributes {dimension_semantics = [#tpu.dimension_semantics<parallel>], iteration_bounds = array<i64: 1>, scalar_prefetch = 0 : i64, scratch_operands = 0 : i64, tpu.core_type = #tpu.core_type<tc>, window_params = [{transform_indices = @transform_0, window_bounds = array<i64: 8, 16>}, {pipeline_mode = #tpu.pipeline_mode<synchronous>, transform_indices = @transform_1, window_bounds = array<i64: 16, 32>}, {pipeline_mode = #tpu.pipeline_mode<synchronous>, transform_indices = @transform_2, window_bounds = array<i64: 1, 32>}, {pipeline_mode = #tpu.pipeline_mode<synchronous>, transform_indices = @transform_3, window_bounds = array<i64: 3, 32, 32>}, {pipeline_mode = #tpu.pipeline_mode<synchronous>, transform_indices = @transform_4, window_bounds = array<i64: 3, 32, 32>}, {pipeline_mode = #tpu.pipeline_mode<synchronous>, transform_indices = @transform_5, window_bounds = array<i64: 3, 32>}, {pipeline_mode = #tpu.pipeline_mode<synchronous>, transform_indices = @transform_6, window_bounds = array<i64: 3, 32>}, {pipeline_mode = #tpu.pipeline_mode<synchronous>, transform_indices = @transform_7, window_bounds = array<i64: 3, 32, 512>}, {pipeline_mode = #tpu.pipeline_mode<synchronous>, transform_indices = @transform_8, window_bounds = array<i64: 3, 512>}, {pipeline_mode = #tpu.pipeline_mode<synchronous>, transform_indices = @transform_9, window_bounds = array<i64: 3, 512, 32>}, {pipeline_mode = #tpu.pipeline_mode<synchronous>, transform_indices = @transform_10, window_bounds = array<i64: 3, 32>}, {pipeline_mode = #tpu.pipeline_mode<synchronous>, transform_indices = @transform_11, window_bounds = array<i64: 3, 32>}, {pipeline_mode = #tpu.pipeline_mode<synchronous>, transform_indices = @transform_12, window_bounds = array<i64: 3, 32>}, {pipeline_mode = #tpu.pipeline_mode<synchronous>, transform_indices = @transform_13, window_bounds = array<i64: 3, 32>}, {pipeline_mode = #tpu.pipeline_mode<synchronous>, transform_indices = @transform_14, window_bounds = array<i64: 3, 32>}, {pipeline_mode = #tpu.pipeline_mode<synchronous>, transform_indices = @transform_15, window_bounds = array<i64: 1, 32>}, {pipeline_mode = #tpu.pipeline_mode<synchronous>, transform_indices = @transform_16, window_bounds = array<i64: 1, 32>}, {pipeline_mode = #tpu.pipeline_mode<synchronous>, transform_indices = @transform_17, window_bounds = array<i64: 32, 16>}, {pipeline_mode = #tpu.pipeline_mode<synchronous>, transform_indices = @transform_18, window_bounds = array<i64: 1, 16>}, {transform_indices = @transform_19, window_bounds = array<i64: 8, 16>}]} {
    %c0 = arith.constant 0 : index
    %c0_0 = arith.constant 0 : index
    %0 = vector.load %arg1[%c0, %c0_0] : memref<8x16xf32, #tpu.memory_space<vmem>>, vector<8x16xf32>
    %1 = arith.truncf %0 : vector<8x16xf32> to vector<8x16xbf16>
    %c0_1 = arith.constant 0 : index
    %c0_2 = arith.constant 0 : index
    %2 = vector.load %arg2[%c0_1, %c0_2] : memref<16x32xbf16, #tpu.memory_space<vmem>>, vector<16x32xbf16>
    %cst = arith.constant dense<0.000000e+00> : vector<8x32xf32>
    %3 = tpu.matmul %1, %2, %cst {dimension_numbers = #tpu.dot_dimension_numbers<[1], [0], [0], [1], [0, 0, 1, 1], [], []>} : vector<8x16xbf16>, vector<16x32xbf16>, vector<8x32xf32> -> vector<8x32xf32>
    %c0_3 = arith.constant 0 : index
    %c0_4 = arith.constant 0 : index
    %4 = vector.load %arg3[%c0_3, %c0_4] : memref<1x32xf32, #tpu.memory_space<vmem>>, vector<1x32xf32>
    %5 = vector.broadcast %4 : vector<1x32xf32> to vector<8x32xf32>
    %6 = arith.addf %3, %5 : vector<8x32xf32>
    %7 = arith.truncf %6 : vector<8x32xf32> to vector<8x32xbf16>
    %c0_5 = arith.constant 0 : index
    %c0_6 = arith.constant 0 : index
    %c0_7 = arith.constant 0 : index
    %8 = vector.load %arg4[%c0_5, %c0_6, %c0_7] : memref<3x32x32xbf16, #tpu.memory_space<vmem>>, vector<1x32x32xbf16>
    %9 = vector.shape_cast %8 : vector<1x32x32xbf16> to vector<32x32xbf16>
    %cst_8 = arith.constant dense<0.000000e+00> : vector<8x32xf32>
    %10 = tpu.matmul %7, %9, %cst_8 {dimension_numbers = #tpu.dot_dimension_numbers<[1], [0], [0], [1], [0, 0, 1, 1], [], []>} : vector<8x32xbf16>, vector<32x32xbf16>, vector<8x32xf32> -> vector<8x32xf32>
    %c0_9 = arith.constant 0 : index
    %c0_10 = arith.constant 0 : index
    %11 = vector.load %arg6[%c0_9, %c0_10] : memref<3x32xf32, #tpu.memory_space<vmem>>, vector<1x32xf32>
    %12 = vector.broadcast %11 : vector<1x32xf32> to vector<8x32xf32>
    %13 = arith.addf %10, %12 : vector<8x32xf32>
    %14 = arith.truncf %13 : vector<8x32xf32> to vector<8x32xbf16>
    %c0_11 = arith.constant 0 : index
    %c0_12 = arith.constant 0 : index
    %c0_13 = arith.constant 0 : index
    %15 = vector.load %arg5[%c0_11, %c0_12, %c0_13] : memref<3x32x32xbf16, #tpu.memory_space<vmem>>, vector<1x32x32xbf16>
    %16 = vector.shape_cast %15 : vector<1x32x32xbf16> to vector<32x32xbf16>
    %cst_14 = arith.constant dense<0.000000e+00> : vector<8x32xf32>
    %17 = tpu.matmul %14, %16, %cst_14 {dimension_numbers = #tpu.dot_dimension_numbers<[1], [0], [0], [1], [0, 0, 1, 1], [], []>} : vector<8x32xbf16>, vector<32x32xbf16>, vector<8x32xf32> -> vector<8x32xf32>
    %c0_15 = arith.constant 0 : index
    %c0_16 = arith.constant 0 : index
    %18 = vector.load %arg7[%c0_15, %c0_16] : memref<3x32xf32, #tpu.memory_space<vmem>>, vector<1x32xf32>
    %19 = vector.broadcast %18 : vector<1x32xf32> to vector<8x32xf32>
    %20 = arith.addf %17, %19 : vector<8x32xf32>
    %21 = arith.addf %6, %20 : vector<8x32xf32>
    %c0_17 = arith.constant 0 : index
    %c0_18 = arith.constant 0 : index
    %22 = vector.load %arg12[%c0_17, %c0_18] : memref<3x32xf32, #tpu.memory_space<vmem>>, vector<1x32xf32>
    %c0_19 = arith.constant 0 : index
    %c0_20 = arith.constant 0 : index
    %23 = vector.load %arg13[%c0_19, %c0_20] : memref<3x32xf32, #tpu.memory_space<vmem>>, vector<1x32xf32>
    %cst_21 = arith.constant dense<0.000000e+00> : vector<8xf32>
    %24 = vector.multi_reduction <add>, %21, %cst_21 [1] : vector<8x32xf32> to vector<8xf32>
    %25 = vector.shape_cast %24 : vector<8xf32> to vector<8x1xf32>
    %cst_22 = arith.constant 3.200000e+01 : f32
    %26 = vector.broadcast %cst_22 : f32 to vector<8x1xf32>
    %27 = arith.divf %25, %26 : vector<8x1xf32>
    %28 = vector.broadcast %27 : vector<8x1xf32> to vector<8x32xf32>
    %29 = arith.subf %21, %28 : vector<8x32xf32>
    %30 = arith.mulf %29, %29 : vector<8x32xf32>
    %cst_23 = arith.constant dense<0.000000e+00> : vector<8xf32>
    %31 = vector.multi_reduction <add>, %30, %cst_23 [1] : vector<8x32xf32> to vector<8xf32>
    %32 = vector.shape_cast %31 : vector<8xf32> to vector<8x1xf32>
    %cst_24 = arith.constant 3.200000e+01 : f32
    %33 = vector.broadcast %cst_24 : f32 to vector<8x1xf32>
    %34 = arith.divf %32, %33 : vector<8x1xf32>
    %35 = vector.broadcast %27 : vector<8x1xf32> to vector<8x32xf32>
    %36 = arith.subf %21, %35 : vector<8x32xf32>
    %cst_25 = arith.constant 9.99999974E-6 : f32
    %37 = vector.broadcast %cst_25 : f32 to vector<8x1xf32>
    %38 = arith.addf %34, %37 : vector<8x1xf32>
    %39 = math.rsqrt %38 : vector<8x1xf32>
    %40 = vector.broadcast %39 : vector<8x1xf32> to vector<8x32xf32>
    %41 = arith.mulf %36, %40 : vector<8x32xf32>
    %42 = vector.broadcast %22 : vector<1x32xf32> to vector<8x32xf32>
    %43 = arith.mulf %41, %42 : vector<8x32xf32>
    %44 = vector.broadcast %23 : vector<1x32xf32> to vector<8x32xf32>
    %45 = arith.addf %43, %44 : vector<8x32xf32>
    %46 = arith.truncf %45 : vector<8x32xf32> to vector<8x32xbf16>
    %c0_26 = arith.constant 0 : index
    %c0_27 = arith.constant 0 : index
    %c0_28 = arith.constant 0 : index
    %47 = vector.load %arg8[%c0_26, %c0_27, %c0_28] : memref<3x32x512xbf16, #tpu.memory_space<vmem>>, vector<1x32x512xbf16>
    %48 = vector.shape_cast %47 : vector<1x32x512xbf16> to vector<32x512xbf16>
    %cst_29 = arith.constant dense<0.000000e+00> : vector<8x512xf32>
    %49 = tpu.matmul %46, %48, %cst_29 {dimension_numbers = #tpu.dot_dimension_numbers<[1], [0], [0], [1], [0, 0, 1, 1], [], []>} : vector<8x32xbf16>, vector<32x512xbf16>, vector<8x512xf32> -> vector<8x512xf32>
    %c0_30 = arith.constant 0 : index
    %c0_31 = arith.constant 0 : index
    %50 = vector.load %arg9[%c0_30, %c0_31] : memref<3x512xf32, #tpu.memory_space<vmem>>, vector<1x512xf32>
    %51 = vector.broadcast %50 : vector<1x512xf32> to vector<8x512xf32>
    %52 = arith.addf %49, %51 : vector<8x512xf32>
    %cst_32 = arith.constant 5.000000e-01 : f32
    %53 = vector.broadcast %cst_32 : f32 to vector<8x512xf32>
    %54 = arith.mulf %53, %52 : vector<8x512xf32>
    %cst_33 = arith.constant 4.471500e-02 : f32
    %55 = vector.broadcast %cst_33 : f32 to vector<8x512xf32>
    %56 = arith.mulf %55, %52 : vector<8x512xf32>
    %57 = arith.mulf %56, %52 : vector<8x512xf32>
    %58 = arith.mulf %57, %52 : vector<8x512xf32>
    %59 = arith.addf %52, %58 : vector<8x512xf32>
    %cst_34 = arith.constant 0.797884583 : f32
    %60 = vector.broadcast %cst_34 : f32 to vector<8x512xf32>
    %61 = arith.mulf %60, %59 : vector<8x512xf32>
    %62 = math.tanh %61 : vector<8x512xf32>
    %cst_35 = arith.constant 1.000000e+00 : f32
    %63 = vector.broadcast %cst_35 : f32 to vector<8x512xf32>
    %64 = arith.addf %63, %62 : vector<8x512xf32>
    %65 = arith.mulf %54, %64 : vector<8x512xf32>
    %66 = arith.truncf %65 : vector<8x512xf32> to vector<8x512xbf16>
    %c0_36 = arith.constant 0 : index
    %c0_37 = arith.constant 0 : index
    %c0_38 = arith.constant 0 : index
    %67 = vector.load %arg10[%c0_36, %c0_37, %c0_38] : memref<3x512x32xbf16, #tpu.memory_space<vmem>>, vector<1x512x32xbf16>
    %68 = vector.shape_cast %67 : vector<1x512x32xbf16> to vector<512x32xbf16>
    %cst_39 = arith.constant dense<0.000000e+00> : vector<8x32xf32>
    %69 = tpu.matmul %66, %68, %cst_39 {dimension_numbers = #tpu.dot_dimension_numbers<[1], [0], [0], [1], [0, 0, 1, 1], [], []>} : vector<8x512xbf16>, vector<512x32xbf16>, vector<8x32xf32> -> vector<8x32xf32>
    %c0_40 = arith.constant 0 : index
    %c0_41 = arith.constant 0 : index
    %70 = vector.load %arg11[%c0_40, %c0_41] : memref<3x32xf32, #tpu.memory_space<vmem>>, vector<1x32xf32>
    %71 = vector.broadcast %70 : vector<1x32xf32> to vector<8x32xf32>
    %72 = arith.addf %69, %71 : vector<8x32xf32>
    %73 = arith.addf %45, %72 : vector<8x32xf32>
    %c0_42 = arith.constant 0 : index
    %c0_43 = arith.constant 0 : index
    %74 = vector.load %arg14[%c0_42, %c0_43] : memref<3x32xf32, #tpu.memory_space<vmem>>, vector<1x32xf32>
    %c0_44 = arith.constant 0 : index
    %c0_45 = arith.constant 0 : index
    %75 = vector.load %arg15[%c0_44, %c0_45] : memref<3x32xf32, #tpu.memory_space<vmem>>, vector<1x32xf32>
    %cst_46 = arith.constant dense<0.000000e+00> : vector<8xf32>
    %76 = vector.multi_reduction <add>, %73, %cst_46 [1] : vector<8x32xf32> to vector<8xf32>
    %77 = vector.shape_cast %76 : vector<8xf32> to vector<8x1xf32>
    %cst_47 = arith.constant 3.200000e+01 : f32
    %78 = vector.broadcast %cst_47 : f32 to vector<8x1xf32>
    %79 = arith.divf %77, %78 : vector<8x1xf32>
    %80 = vector.broadcast %79 : vector<8x1xf32> to vector<8x32xf32>
    %81 = arith.subf %73, %80 : vector<8x32xf32>
    %82 = arith.mulf %81, %81 : vector<8x32xf32>
    %cst_48 = arith.constant dense<0.000000e+00> : vector<8xf32>
    %83 = vector.multi_reduction <add>, %82, %cst_48 [1] : vector<8x32xf32> to vector<8xf32>
    %84 = vector.shape_cast %83 : vector<8xf32> to vector<8x1xf32>
    %cst_49 = arith.constant 3.200000e+01 : f32
    %85 = vector.broadcast %cst_49 : f32 to vector<8x1xf32>
    %86 = arith.divf %84, %85 : vector<8x1xf32>
    %87 = vector.broadcast %79 : vector<8x1xf32> to vector<8x32xf32>
    %88 = arith.subf %73, %87 : vector<8x32xf32>
    %cst_50 = arith.constant 9.99999974E-6 : f32
    %89 = vector.broadcast %cst_50 : f32 to vector<8x1xf32>
    %90 = arith.addf %86, %89 : vector<8x1xf32>
    %91 = math.rsqrt %90 : vector<8x1xf32>
    %92 = vector.broadcast %91 : vector<8x1xf32> to vector<8x32xf32>
    %93 = arith.mulf %88, %92 : vector<8x32xf32>
    %94 = vector.broadcast %74 : vector<1x32xf32> to vector<8x32xf32>
    %95 = arith.mulf %93, %94 : vector<8x32xf32>
    %96 = vector.broadcast %75 : vector<1x32xf32> to vector<8x32xf32>
    %97 = arith.addf %95, %96 : vector<8x32xf32>
    %98 = arith.truncf %97 : vector<8x32xf32> to vector<8x32xbf16>
    %c1 = arith.constant 1 : index
    %c0_51 = arith.constant 0 : index
    %c0_52 = arith.constant 0 : index
    %99 = vector.load %arg4[%c1, %c0_51, %c0_52] : memref<3x32x32xbf16, #tpu.memory_space<vmem>>, vector<1x32x32xbf16>
    %100 = vector.shape_cast %99 : vector<1x32x32xbf16> to vector<32x32xbf16>
    %cst_53 = arith.constant dense<0.000000e+00> : vector<8x32xf32>
    %101 = tpu.matmul %98, %100, %cst_53 {dimension_numbers = #tpu.dot_dimension_numbers<[1], [0], [0], [1], [0, 0, 1, 1], [], []>} : vector<8x32xbf16>, vector<32x32xbf16>, vector<8x32xf32> -> vector<8x32xf32>
    %c1_54 = arith.constant 1 : index
    %c0_55 = arith.constant 0 : index
    %102 = vector.load %arg6[%c1_54, %c0_55] : memref<3x32xf32, #tpu.memory_space<vmem>>, vector<1x32xf32>
    %103 = vector.broadcast %102 : vector<1x32xf32> to vector<8x32xf32>
    %104 = arith.addf %101, %103 : vector<8x32xf32>
    %105 = arith.truncf %104 : vector<8x32xf32> to vector<8x32xbf16>
    %c1_56 = arith.constant 1 : index
    %c0_57 = arith.constant 0 : index
    %c0_58 = arith.constant 0 : index
    %106 = vector.load %arg5[%c1_56, %c0_57, %c0_58] : memref<3x32x32xbf16, #tpu.memory_space<vmem>>, vector<1x32x32xbf16>
    %107 = vector.shape_cast %106 : vector<1x32x32xbf16> to vector<32x32xbf16>
    %cst_59 = arith.constant dense<0.000000e+00> : vector<8x32xf32>
    %108 = tpu.matmul %105, %107, %cst_59 {dimension_numbers = #tpu.dot_dimension_numbers<[1], [0], [0], [1], [0, 0, 1, 1], [], []>} : vector<8x32xbf16>, vector<32x32xbf16>, vector<8x32xf32> -> vector<8x32xf32>
    %c1_60 = arith.constant 1 : index
    %c0_61 = arith.constant 0 : index
    %109 = vector.load %arg7[%c1_60, %c0_61] : memref<3x32xf32, #tpu.memory_space<vmem>>, vector<1x32xf32>
    %110 = vector.broadcast %109 : vector<1x32xf32> to vector<8x32xf32>
    %111 = arith.addf %108, %110 : vector<8x32xf32>
    %112 = arith.addf %97, %111 : vector<8x32xf32>
    %c1_62 = arith.constant 1 : index
    %c0_63 = arith.constant 0 : index
    %113 = vector.load %arg12[%c1_62, %c0_63] : memref<3x32xf32, #tpu.memory_space<vmem>>, vector<1x32xf32>
    %c1_64 = arith.constant 1 : index
    %c0_65 = arith.constant 0 : index
    %114 = vector.load %arg13[%c1_64, %c0_65] : memref<3x32xf32, #tpu.memory_space<vmem>>, vector<1x32xf32>
    %cst_66 = arith.constant dense<0.000000e+00> : vector<8xf32>
    %115 = vector.multi_reduction <add>, %112, %cst_66 [1] : vector<8x32xf32> to vector<8xf32>
    %116 = vector.shape_cast %115 : vector<8xf32> to vector<8x1xf32>
    %cst_67 = arith.constant 3.200000e+01 : f32
    %117 = vector.broadcast %cst_67 : f32 to vector<8x1xf32>
    %118 = arith.divf %116, %117 : vector<8x1xf32>
    %119 = vector.broadcast %118 : vector<8x1xf32> to vector<8x32xf32>
    %120 = arith.subf %112, %119 : vector<8x32xf32>
    %121 = arith.mulf %120, %120 : vector<8x32xf32>
    %cst_68 = arith.constant dense<0.000000e+00> : vector<8xf32>
    %122 = vector.multi_reduction <add>, %121, %cst_68 [1] : vector<8x32xf32> to vector<8xf32>
    %123 = vector.shape_cast %122 : vector<8xf32> to vector<8x1xf32>
    %cst_69 = arith.constant 3.200000e+01 : f32
    %124 = vector.broadcast %cst_69 : f32 to vector<8x1xf32>
    %125 = arith.divf %123, %124 : vector<8x1xf32>
    %126 = vector.broadcast %118 : vector<8x1xf32> to vector<8x32xf32>
    %127 = arith.subf %112, %126 : vector<8x32xf32>
    %cst_70 = arith.constant 9.99999974E-6 : f32
    %128 = vector.broadcast %cst_70 : f32 to vector<8x1xf32>
    %129 = arith.addf %125, %128 : vector<8x1xf32>
    %130 = math.rsqrt %129 : vector<8x1xf32>
    %131 = vector.broadcast %130 : vector<8x1xf32> to vector<8x32xf32>
    %132 = arith.mulf %127, %131 : vector<8x32xf32>
    %133 = vector.broadcast %113 : vector<1x32xf32> to vector<8x32xf32>
    %134 = arith.mulf %132, %133 : vector<8x32xf32>
    %135 = vector.broadcast %114 : vector<1x32xf32> to vector<8x32xf32>
    %136 = arith.addf %134, %135 : vector<8x32xf32>
    %137 = arith.truncf %136 : vector<8x32xf32> to vector<8x32xbf16>
    %c1_71 = arith.constant 1 : index
    %c0_72 = arith.constant 0 : index
    %c0_73 = arith.constant 0 : index
    %138 = vector.load %arg8[%c1_71, %c0_72, %c0_73] : memref<3x32x512xbf16, #tpu.memory_space<vmem>>, vector<1x32x512xbf16>
    %139 = vector.shape_cast %138 : vector<1x32x512xbf16> to vector<32x512xbf16>
    %cst_74 = arith.constant dense<0.000000e+00> : vector<8x512xf32>
    %140 = tpu.matmul %137, %139, %cst_74 {dimension_numbers = #tpu.dot_dimension_numbers<[1], [0], [0], [1], [0, 0, 1, 1], [], []>} : vector<8x32xbf16>, vector<32x512xbf16>, vector<8x512xf32> -> vector<8x512xf32>
    %c1_75 = arith.constant 1 : index
    %c0_76 = arith.constant 0 : index
    %141 = vector.load %arg9[%c1_75, %c0_76] : memref<3x512xf32, #tpu.memory_space<vmem>>, vector<1x512xf32>
    %142 = vector.broadcast %141 : vector<1x512xf32> to vector<8x512xf32>
    %143 = arith.addf %140, %142 : vector<8x512xf32>
    %cst_77 = arith.constant 5.000000e-01 : f32
    %144 = vector.broadcast %cst_77 : f32 to vector<8x512xf32>
    %145 = arith.mulf %144, %143 : vector<8x512xf32>
    %cst_78 = arith.constant 4.471500e-02 : f32
    %146 = vector.broadcast %cst_78 : f32 to vector<8x512xf32>
    %147 = arith.mulf %146, %143 : vector<8x512xf32>
    %148 = arith.mulf %147, %143 : vector<8x512xf32>
    %149 = arith.mulf %148, %143 : vector<8x512xf32>
    %150 = arith.addf %143, %149 : vector<8x512xf32>
    %cst_79 = arith.constant 0.797884583 : f32
    %151 = vector.broadcast %cst_79 : f32 to vector<8x512xf32>
    %152 = arith.mulf %151, %150 : vector<8x512xf32>
    %153 = math.tanh %152 : vector<8x512xf32>
    %cst_80 = arith.constant 1.000000e+00 : f32
    %154 = vector.broadcast %cst_80 : f32 to vector<8x512xf32>
    %155 = arith.addf %154, %153 : vector<8x512xf32>
    %156 = arith.mulf %145, %155 : vector<8x512xf32>
    %157 = arith.truncf %156 : vector<8x512xf32> to vector<8x512xbf16>
    %c1_81 = arith.constant 1 : index
    %c0_82 = arith.constant 0 : index
    %c0_83 = arith.constant 0 : index
    %158 = vector.load %arg10[%c1_81, %c0_82, %c0_83] : memref<3x512x32xbf16, #tpu.memory_space<vmem>>, vector<1x512x32xbf16>
    %159 = vector.shape_cast %158 : vector<1x512x32xbf16> to vector<512x32xbf16>
    %cst_84 = arith.constant dense<0.000000e+00> : vector<8x32xf32>
    %160 = tpu.matmul %157, %159, %cst_84 {dimension_numbers = #tpu.dot_dimension_numbers<[1], [0], [0], [1], [0, 0, 1, 1], [], []>} : vector<8x512xbf16>, vector<512x32xbf16>, vector<8x32xf32> -> vector<8x32xf32>
    %c1_85 = arith.constant 1 : index
    %c0_86 = arith.constant 0 : index
    %161 = vector.load %arg11[%c1_85, %c0_86] : memref<3x32xf32, #tpu.memory_space<vmem>>, vector<1x32xf32>
    %162 = vector.broadcast %161 : vector<1x32xf32> to vector<8x32xf32>
    %163 = arith.addf %160, %162 : vector<8x32xf32>
    %164 = arith.addf %136, %163 : vector<8x32xf32>
    %c1_87 = arith.constant 1 : index
    %c0_88 = arith.constant 0 : index
    %165 = vector.load %arg14[%c1_87, %c0_88] : memref<3x32xf32, #tpu.memory_space<vmem>>, vector<1x32xf32>
    %c1_89 = arith.constant 1 : index
    %c0_90 = arith.constant 0 : index
    %166 = vector.load %arg15[%c1_89, %c0_90] : memref<3x32xf32, #tpu.memory_space<vmem>>, vector<1x32xf32>
    %cst_91 = arith.constant dense<0.000000e+00> : vector<8xf32>
    %167 = vector.multi_reduction <add>, %164, %cst_91 [1] : vector<8x32xf32> to vector<8xf32>
    %168 = vector.shape_cast %167 : vector<8xf32> to vector<8x1xf32>
    %cst_92 = arith.constant 3.200000e+01 : f32
    %169 = vector.broadcast %cst_92 : f32 to vector<8x1xf32>
    %170 = arith.divf %168, %169 : vector<8x1xf32>
    %171 = vector.broadcast %170 : vector<8x1xf32> to vector<8x32xf32>
    %172 = arith.subf %164, %171 : vector<8x32xf32>
    %173 = arith.mulf %172, %172 : vector<8x32xf32>
    %cst_93 = arith.constant dense<0.000000e+00> : vector<8xf32>
    %174 = vector.multi_reduction <add>, %173, %cst_93 [1] : vector<8x32xf32> to vector<8xf32>
    %175 = vector.shape_cast %174 : vector<8xf32> to vector<8x1xf32>
    %cst_94 = arith.constant 3.200000e+01 : f32
    %176 = vector.broadcast %cst_94 : f32 to vector<8x1xf32>
    %177 = arith.divf %175, %176 : vector<8x1xf32>
    %178 = vector.broadcast %170 : vector<8x1xf32> to vector<8x32xf32>
    %179 = arith.subf %164, %178 : vector<8x32xf32>
    %cst_95 = arith.constant 9.99999974E-6 : f32
    %180 = vector.broadcast %cst_95 : f32 to vector<8x1xf32>
    %181 = arith.addf %177, %180 : vector<8x1xf32>
    %182 = math.rsqrt %181 : vector<8x1xf32>
    %183 = vector.broadcast %182 : vector<8x1xf32> to vector<8x32xf32>
    %184 = arith.mulf %179, %183 : vector<8x32xf32>
    %185 = vector.broadcast %165 : vector<1x32xf32> to vector<8x32xf32>
    %186 = arith.mulf %184, %185 : vector<8x32xf32>
    %187 = vector.broadcast %166 : vector<1x32xf32> to vector<8x32xf32>
    %188 = arith.addf %186, %187 : vector<8x32xf32>
    %189 = arith.truncf %188 : vector<8x32xf32> to vector<8x32xbf16>
    %c2 = arith.constant 2 : index
    %c0_96 = arith.constant 0 : index
    %c0_97 = arith.constant 0 : index
    %190 = vector.load %arg4[%c2, %c0_96, %c0_97] : memref<3x32x32xbf16, #tpu.memory_space<vmem>>, vector<1x32x32xbf16>
    %191 = vector.shape_cast %190 : vector<1x32x32xbf16> to vector<32x32xbf16>
    %cst_98 = arith.constant dense<0.000000e+00> : vector<8x32xf32>
    %192 = tpu.matmul %189, %191, %cst_98 {dimension_numbers = #tpu.dot_dimension_numbers<[1], [0], [0], [1], [0, 0, 1, 1], [], []>} : vector<8x32xbf16>, vector<32x32xbf16>, vector<8x32xf32> -> vector<8x32xf32>
    %c2_99 = arith.constant 2 : index
    %c0_100 = arith.constant 0 : index
    %193 = vector.load %arg6[%c2_99, %c0_100] : memref<3x32xf32, #tpu.memory_space<vmem>>, vector<1x32xf32>
    %194 = vector.broadcast %193 : vector<1x32xf32> to vector<8x32xf32>
    %195 = arith.addf %192, %194 : vector<8x32xf32>
    %196 = arith.truncf %195 : vector<8x32xf32> to vector<8x32xbf16>
    %c2_101 = arith.constant 2 : index
    %c0_102 = arith.constant 0 : index
    %c0_103 = arith.constant 0 : index
    %197 = vector.load %arg5[%c2_101, %c0_102, %c0_103] : memref<3x32x32xbf16, #tpu.memory_space<vmem>>, vector<1x32x32xbf16>
    %198 = vector.shape_cast %197 : vector<1x32x32xbf16> to vector<32x32xbf16>
    %cst_104 = arith.constant dense<0.000000e+00> : vector<8x32xf32>
    %199 = tpu.matmul %196, %198, %cst_104 {dimension_numbers = #tpu.dot_dimension_numbers<[1], [0], [0], [1], [0, 0, 1, 1], [], []>} : vector<8x32xbf16>, vector<32x32xbf16>, vector<8x32xf32> -> vector<8x32xf32>
    %c2_105 = arith.constant 2 : index
    %c0_106 = arith.constant 0 : index
    %200 = vector.load %arg7[%c2_105, %c0_106] : memref<3x32xf32, #tpu.memory_space<vmem>>, vector<1x32xf32>
    %201 = vector.broadcast %200 : vector<1x32xf32> to vector<8x32xf32>
    %202 = arith.addf %199, %201 : vector<8x32xf32>
    %203 = arith.addf %188, %202 : vector<8x32xf32>
    %c2_107 = arith.constant 2 : index
    %c0_108 = arith.constant 0 : index
    %204 = vector.load %arg12[%c2_107, %c0_108] : memref<3x32xf32, #tpu.memory_space<vmem>>, vector<1x32xf32>
    %c2_109 = arith.constant 2 : index
    %c0_110 = arith.constant 0 : index
    %205 = vector.load %arg13[%c2_109, %c0_110] : memref<3x32xf32, #tpu.memory_space<vmem>>, vector<1x32xf32>
    %cst_111 = arith.constant dense<0.000000e+00> : vector<8xf32>
    %206 = vector.multi_reduction <add>, %203, %cst_111 [1] : vector<8x32xf32> to vector<8xf32>
    %207 = vector.shape_cast %206 : vector<8xf32> to vector<8x1xf32>
    %cst_112 = arith.constant 3.200000e+01 : f32
    %208 = vector.broadcast %cst_112 : f32 to vector<8x1xf32>
    %209 = arith.divf %207, %208 : vector<8x1xf32>
    %210 = vector.broadcast %209 : vector<8x1xf32> to vector<8x32xf32>
    %211 = arith.subf %203, %210 : vector<8x32xf32>
    %212 = arith.mulf %211, %211 : vector<8x32xf32>
    %cst_113 = arith.constant dense<0.000000e+00> : vector<8xf32>
    %213 = vector.multi_reduction <add>, %212, %cst_113 [1] : vector<8x32xf32> to vector<8xf32>
    %214 = vector.shape_cast %213 : vector<8xf32> to vector<8x1xf32>
    %cst_114 = arith.constant 3.200000e+01 : f32
    %215 = vector.broadcast %cst_114 : f32 to vector<8x1xf32>
    %216 = arith.divf %214, %215 : vector<8x1xf32>
    %217 = vector.broadcast %209 : vector<8x1xf32> to vector<8x32xf32>
    %218 = arith.subf %203, %217 : vector<8x32xf32>
    %cst_115 = arith.constant 9.99999974E-6 : f32
    %219 = vector.broadcast %cst_115 : f32 to vector<8x1xf32>
    %220 = arith.addf %216, %219 : vector<8x1xf32>
    %221 = math.rsqrt %220 : vector<8x1xf32>
    %222 = vector.broadcast %221 : vector<8x1xf32> to vector<8x32xf32>
    %223 = arith.mulf %218, %222 : vector<8x32xf32>
    %224 = vector.broadcast %204 : vector<1x32xf32> to vector<8x32xf32>
    %225 = arith.mulf %223, %224 : vector<8x32xf32>
    %226 = vector.broadcast %205 : vector<1x32xf32> to vector<8x32xf32>
    %227 = arith.addf %225, %226 : vector<8x32xf32>
    %228 = arith.truncf %227 : vector<8x32xf32> to vector<8x32xbf16>
    %c2_116 = arith.constant 2 : index
    %c0_117 = arith.constant 0 : index
    %c0_118 = arith.constant 0 : index
    %229 = vector.load %arg8[%c2_116, %c0_117, %c0_118] : memref<3x32x512xbf16, #tpu.memory_space<vmem>>, vector<1x32x512xbf16>
    %230 = vector.shape_cast %229 : vector<1x32x512xbf16> to vector<32x512xbf16>
    %cst_119 = arith.constant dense<0.000000e+00> : vector<8x512xf32>
    %231 = tpu.matmul %228, %230, %cst_119 {dimension_numbers = #tpu.dot_dimension_numbers<[1], [0], [0], [1], [0, 0, 1, 1], [], []>} : vector<8x32xbf16>, vector<32x512xbf16>, vector<8x512xf32> -> vector<8x512xf32>
    %c2_120 = arith.constant 2 : index
    %c0_121 = arith.constant 0 : index
    %232 = vector.load %arg9[%c2_120, %c0_121] : memref<3x512xf32, #tpu.memory_space<vmem>>, vector<1x512xf32>
    %233 = vector.broadcast %232 : vector<1x512xf32> to vector<8x512xf32>
    %234 = arith.addf %231, %233 : vector<8x512xf32>
    %cst_122 = arith.constant 5.000000e-01 : f32
    %235 = vector.broadcast %cst_122 : f32 to vector<8x512xf32>
    %236 = arith.mulf %235, %234 : vector<8x512xf32>
    %cst_123 = arith.constant 4.471500e-02 : f32
    %237 = vector.broadcast %cst_123 : f32 to vector<8x512xf32>
    %238 = arith.mulf %237, %234 : vector<8x512xf32>
    %239 = arith.mulf %238, %234 : vector<8x512xf32>
    %240 = arith.mulf %239, %234 : vector<8x512xf32>
    %241 = arith.addf %234, %240 : vector<8x512xf32>
    %cst_124 = arith.constant 0.797884583 : f32
    %242 = vector.broadcast %cst_124 : f32 to vector<8x512xf32>
    %243 = arith.mulf %242, %241 : vector<8x512xf32>
    %244 = math.tanh %243 : vector<8x512xf32>
    %cst_125 = arith.constant 1.000000e+00 : f32
    %245 = vector.broadcast %cst_125 : f32 to vector<8x512xf32>
    %246 = arith.addf %245, %244 : vector<8x512xf32>
    %247 = arith.mulf %236, %246 : vector<8x512xf32>
    %248 = arith.truncf %247 : vector<8x512xf32> to vector<8x512xbf16>
    %c2_126 = arith.constant 2 : index
    %c0_127 = arith.constant 0 : index
    %c0_128 = arith.constant 0 : index
    %249 = vector.load %arg10[%c2_126, %c0_127, %c0_128] : memref<3x512x32xbf16, #tpu.memory_space<vmem>>, vector<1x512x32xbf16>
    %250 = vector.shape_cast %249 : vector<1x512x32xbf16> to vector<512x32xbf16>
    %cst_129 = arith.constant dense<0.000000e+00> : vector<8x32xf32>
    %251 = tpu.matmul %248, %250, %cst_129 {dimension_numbers = #tpu.dot_dimension_numbers<[1], [0], [0], [1], [0, 0, 1, 1], [], []>} : vector<8x512xbf16>, vector<512x32xbf16>, vector<8x32xf32> -> vector<8x32xf32>
    %c2_130 = arith.constant 2 : index
    %c0_131 = arith.constant 0 : index
    %252 = vector.load %arg11[%c2_130, %c0_131] : memref<3x32xf32, #tpu.memory_space<vmem>>, vector<1x32xf32>
    %253 = vector.broadcast %252 : vector<1x32xf32> to vector<8x32xf32>
    %254 = arith.addf %251, %253 : vector<8x32xf32>
    %255 = arith.addf %227, %254 : vector<8x32xf32>
    %c2_132 = arith.constant 2 : index
    %c0_133 = arith.constant 0 : index
    %256 = vector.load %arg14[%c2_132, %c0_133] : memref<3x32xf32, #tpu.memory_space<vmem>>, vector<1x32xf32>
    %c2_134 = arith.constant 2 : index
    %c0_135 = arith.constant 0 : index
    %257 = vector.load %arg15[%c2_134, %c0_135] : memref<3x32xf32, #tpu.memory_space<vmem>>, vector<1x32xf32>
    %cst_136 = arith.constant dense<0.000000e+00> : vector<8xf32>
    %258 = vector.multi_reduction <add>, %255, %cst_136 [1] : vector<8x32xf32> to vector<8xf32>
    %259 = vector.shape_cast %258 : vector<8xf32> to vector<8x1xf32>
    %cst_137 = arith.constant 3.200000e+01 : f32
    %260 = vector.broadcast %cst_137 : f32 to vector<8x1xf32>
    %261 = arith.divf %259, %260 : vector<8x1xf32>
    %262 = vector.broadcast %261 : vector<8x1xf32> to vector<8x32xf32>
    %263 = arith.subf %255, %262 : vector<8x32xf32>
    %264 = arith.mulf %263, %263 : vector<8x32xf32>
    %cst_138 = arith.constant dense<0.000000e+00> : vector<8xf32>
    %265 = vector.multi_reduction <add>, %264, %cst_138 [1] : vector<8x32xf32> to vector<8xf32>
    %266 = vector.shape_cast %265 : vector<8xf32> to vector<8x1xf32>
    %cst_139 = arith.constant 3.200000e+01 : f32
    %267 = vector.broadcast %cst_139 : f32 to vector<8x1xf32>
    %268 = arith.divf %266, %267 : vector<8x1xf32>
    %269 = vector.broadcast %261 : vector<8x1xf32> to vector<8x32xf32>
    %270 = arith.subf %255, %269 : vector<8x32xf32>
    %cst_140 = arith.constant 9.99999974E-6 : f32
    %271 = vector.broadcast %cst_140 : f32 to vector<8x1xf32>
    %272 = arith.addf %268, %271 : vector<8x1xf32>
    %273 = math.rsqrt %272 : vector<8x1xf32>
    %274 = vector.broadcast %273 : vector<8x1xf32> to vector<8x32xf32>
    %275 = arith.mulf %270, %274 : vector<8x32xf32>
    %276 = vector.broadcast %256 : vector<1x32xf32> to vector<8x32xf32>
    %277 = arith.mulf %275, %276 : vector<8x32xf32>
    %278 = vector.broadcast %257 : vector<1x32xf32> to vector<8x32xf32>
    %279 = arith.addf %277, %278 : vector<8x32xf32>
    %c0_141 = arith.constant 0 : index
    %c0_142 = arith.constant 0 : index
    %280 = vector.load %arg16[%c0_141, %c0_142] : memref<1x32xf32, #tpu.memory_space<vmem>>, vector<1x32xf32>
    %c0_143 = arith.constant 0 : index
    %c0_144 = arith.constant 0 : index
    %281 = vector.load %arg17[%c0_143, %c0_144] : memref<1x32xf32, #tpu.memory_space<vmem>>, vector<1x32xf32>
    %cst_145 = arith.constant dense<0.000000e+00> : vector<8xf32>
    %282 = vector.multi_reduction <add>, %279, %cst_145 [1] : vector<8x32xf32> to vector<8xf32>
    %283 = vector.shape_cast %282 : vector<8xf32> to vector<8x1xf32>
    %cst_146 = arith.constant 3.200000e+01 : f32
    %284 = vector.broadcast %cst_146 : f32 to vector<8x1xf32>
    %285 = arith.divf %283, %284 : vector<8x1xf32>
    %286 = vector.broadcast %285 : vector<8x1xf32> to vector<8x32xf32>
    %287 = arith.subf %279, %286 : vector<8x32xf32>
    %288 = arith.mulf %287, %287 : vector<8x32xf32>
    %cst_147 = arith.constant dense<0.000000e+00> : vector<8xf32>
    %289 = vector.multi_reduction <add>, %288, %cst_147 [1] : vector<8x32xf32> to vector<8xf32>
    %290 = vector.shape_cast %289 : vector<8xf32> to vector<8x1xf32>
    %cst_148 = arith.constant 3.200000e+01 : f32
    %291 = vector.broadcast %cst_148 : f32 to vector<8x1xf32>
    %292 = arith.divf %290, %291 : vector<8x1xf32>
    %293 = vector.broadcast %285 : vector<8x1xf32> to vector<8x32xf32>
    %294 = arith.subf %279, %293 : vector<8x32xf32>
    %cst_149 = arith.constant 9.99999974E-6 : f32
    %295 = vector.broadcast %cst_149 : f32 to vector<8x1xf32>
    %296 = arith.addf %292, %295 : vector<8x1xf32>
    %297 = math.rsqrt %296 : vector<8x1xf32>
    %298 = vector.broadcast %297 : vector<8x1xf32> to vector<8x32xf32>
    %299 = arith.mulf %294, %298 : vector<8x32xf32>
    %300 = vector.broadcast %280 : vector<1x32xf32> to vector<8x32xf32>
    %301 = arith.mulf %299, %300 : vector<8x32xf32>
    %302 = vector.broadcast %281 : vector<1x32xf32> to vector<8x32xf32>
    %303 = arith.addf %301, %302 : vector<8x32xf32>
    %304 = arith.truncf %303 : vector<8x32xf32> to vector<8x32xbf16>
    %c0_150 = arith.constant 0 : index
    %c0_151 = arith.constant 0 : index
    %305 = vector.load %arg18[%c0_150, %c0_151] : memref<32x16xbf16, #tpu.memory_space<vmem>>, vector<32x16xbf16>
    %cst_152 = arith.constant dense<0.000000e+00> : vector<8x16xf32>
    %306 = tpu.matmul %304, %305, %cst_152 {dimension_numbers = #tpu.dot_dimension_numbers<[1], [0], [0], [1], [0, 0, 1, 1], [], []>} : vector<8x32xbf16>, vector<32x16xbf16>, vector<8x16xf32> -> vector<8x16xf32>
    %c0_153 = arith.constant 0 : index
    %c0_154 = arith.constant 0 : index
    %307 = vector.load %arg19[%c0_153, %c0_154] : memref<1x16xf32, #tpu.memory_space<vmem>>, vector<1x16xf32>
    %308 = vector.broadcast %307 : vector<1x16xf32> to vector<8x16xf32>
    %309 = arith.addf %306, %308 : vector<8x16xf32>
    %c0_155 = arith.constant 0 : index
    %c0_156 = arith.constant 0 : index
    %310 = vector.load %arg20[%c0_155, %c0_156] : memref<8x16xf32, #tpu.memory_space<vmem>>, vector<8x16xf32>
    tpu.vector_store %arg20[%c0_155, %c0_156], %309 {strides = array<i32>} : memref<8x16xf32, #tpu.memory_space<vmem>>, vector<8x16xf32>,
    return
  }
  func.func @transform_0(%arg0: i32) -> (i32, i32) {
    %c0_i32 = arith.constant 0 : i32
    %c0_i32_0 = arith.constant 0 : i32
    return %arg0, %c0_i32 : i32, i32
  }
  func.func @transform_1(%arg0: i32) -> (i32, i32) {
    %c0_i32 = arith.constant 0 : i32
    %c0_i32_0 = arith.constant 0 : i32
    %c0_i32_1 = arith.constant 0 : i32
    return %c0_i32, %c0_i32_0 : i32, i32
  }
  func.func @transform_2(%arg0: i32) -> (i32, i32) {
    %c0_i32 = arith.constant 0 : i32
    %c0_i32_0 = arith.constant 0 : i32
    %c0_i32_1 = arith.constant 0 : i32
    return %c0_i32, %c0_i32_0 : i32, i32
  }
  func.func @transform_3(%arg0: i32) -> (i32, i32, i32) {
    %c0_i32 = arith.constant 0 : i32
    %c0_i32_0 = arith.constant 0 : i32
    %c0_i32_1 = arith.constant 0 : i32
    %c0_i32_2 = arith.constant 0 : i32
    return %c0_i32, %c0_i32_0, %c0_i32_1 : i32, i32, i32
  }
  func.func @transform_4(%arg0: i32) -> (i32, i32, i32) {
    %c0_i32 = arith.constant 0 : i32
    %c0_i32_0 = arith.constant 0 : i32
    %c0_i32_1 = arith.constant 0 : i32
    %c0_i32_2 = arith.constant 0 : i32
    return %c0_i32, %c0_i32_0, %c0_i32_1 : i32, i32, i32
  }
  func.func @transform_5(%arg0: i32) -> (i32, i32) {
    %c0_i32 = arith.constant 0 : i32
    %c0_i32_0 = arith.constant 0 : i32
    %c0_i32_1 = arith.constant 0 : i32
    return %c0_i32, %c0_i32_0 : i32, i32
  }
  func.func @transform_6(%arg0: i32) -> (i32, i32) {
    %c0_i32 = arith.constant 0 : i32
    %c0_i32_0 = arith.constant 0 : i32
    %c0_i32_1 = arith.constant 0 : i32
    return %c0_i32, %c0_i32_0 : i32, i32
  }
  func.func @transform_7(%arg0: i32) -> (i32, i32, i32) {
    %c0_i32 = arith.constant 0 : i32
    %c0_i32_0 = arith.constant 0 : i32
    %c0_i32_1 = arith.constant 0 : i32
    %c0_i32_2 = arith.constant 0 : i32
    return %c0_i32, %c0_i32_0, %c0_i32_1 : i32, i32, i32
  }
  func.func @transform_8(%arg0: i32) -> (i32, i32) {
    %c0_i32 = arith.constant 0 : i32
    %c0_i32_0 = arith.constant 0 : i32
    %c0_i32_1 = arith.constant 0 : i32
    return %c0_i32, %c0_i32_0 : i32, i32
  }
  func.func @transform_9(%arg0: i32) -> (i32, i32, i32) {
    %c0_i32 = arith.constant 0 : i32
    %c0_i32_0 = arith.constant 0 : i32
    %c0_i32_1 = arith.constant 0 : i32
    %c0_i32_2 = arith.constant 0 : i32
    return %c0_i32, %c0_i32_0, %c0_i32_1 : i32, i32, i32
  }
  func.func @transform_10(%arg0: i32) -> (i32, i32) {
    %c0_i32 = arith.constant 0 : i32
    %c0_i32_0 = arith.constant 0 : i32
    %c0_i32_1 = arith.constant 0 : i32
    return %c0_i32, %c0_i32_0 : i32, i32
  }
  func.func @transform_11(%arg0: i32) -> (i32, i32) {
    %c0_i32 = arith.constant 0 : i32
    %c0_i32_0 = arith.constant 0 : i32
    %c0_i32_1 = arith.constant 0 : i32
    return %c0_i32, %c0_i32_0 : i32, i32
  }
  func.func @transform_12(%arg0: i32) -> (i32, i32) {
    %c0_i32 = arith.constant 0 : i32
    %c0_i32_0 = arith.constant 0 : i32
    %c0_i32_1 = arith.constant 0 : i32
    return %c0_i32, %c0_i32_0 : i32, i32
  }
  func.func @transform_13(%arg0: i32) -> (i32, i32) {
    %c0_i32 = arith.constant 0 : i32
    %c0_i32_0 = arith.constant 0 : i32
    %c0_i32_1 = arith.constant 0 : i32
    return %c0_i32, %c0_i32_0 : i32, i32
  }
  func.func @transform_14(%arg0: i32) -> (i32, i32) {
    %c0_i32 = arith.constant 0 : i32
    %c0_i32_0 = arith.constant 0 : i32
    %c0_i32_1 = arith.constant 0 : i32
    return %c0_i32, %c0_i32_0 : i32, i32
  }
  func.func @transform_15(%arg0: i32) -> (i32, i32) {
    %c0_i32 = arith.constant 0 : i32
    %c0_i32_0 = arith.constant 0 : i32
    %c0_i32_1 = arith.constant 0 : i32
    return %c0_i32, %c0_i32_0 : i32, i32
  }
  func.func @transform_16(%arg0: i32) -> (i32, i32) {
    %c0_i32 = arith.constant 0 : i32
    %c0_i32_0 = arith.constant 0 : i32
    %c0_i32_1 = arith.constant 0 : i32
    return %c0_i32, %c0_i32_0 : i32, i32
  }
  func.func @transform_17(%arg0: i32) -> (i32, i32) {
    %c0_i32 = arith.constant 0 : i32
    %c0_i32_0 = arith.constant 0 : i32
    %c0_i32_1 = arith.constant 0 : i32
    return %c0_i32, %c0_i32_0 : i32, i32
  }
  func.func @transform_18(%arg0: i32) -> (i32, i32) {
    %c0_i32 = arith.constant 0 : i32
    %c0_i32_0 = arith.constant 0 : i32
    %c0_i32_1 = arith.constant 0 : i32
    return %c0_i32, %c0_i32_0 : i32, i32
  }
  func.func @transform_19(%arg0: i32) -> (i32, i32) {
    %c0_i32 = arith.constant 0 : i32
    %c0_i32_0 = arith.constant 0 : i32
    return %arg0, %c0_i32 : i32, i32
  }
}

</mosaic_0001>

<llo_original>
// kernel: tpu_custom_call.1
$region0: #{tpu_custom_call.1}
  #allocation0 [shape = 'u32[]', space=smem, size = 0x4, offset = 0x4, fixed_abs, tag = 'smem constant byte address 0x4 - core index']
  #allocation1 [shape = 'u32[144,128]{1,0:T(1,128)}', space=vmem, size = 0x12000, scoped, tag = 'internal scratch']
  %s0 = inlined_call_operand.vmem [shape: f32[8,16], index: 0, kind: input, shape index: {}]
  %s1 = inlined_call_operand.vmem [shape: bf16[16,32], index: 1, kind: input, shape index: {}]
  %s2 = inlined_call_operand.vmem [shape: f32[1,32], index: 2, kind: input, shape index: {}]
  %s3 = inlined_call_operand.vmem [shape: bf16[3,32,32], index: 3, kind: input, shape index: {}]
  %s4 = inlined_call_operand.vmem [shape: bf16[3,32,32], index: 4, kind: input, shape index: {}]
  %s5 = inlined_call_operand.vmem [shape: f32[3,32], index: 5, kind: input, shape index: {}]
  %s6 = inlined_call_operand.vmem [shape: f32[3,32], index: 6, kind: input, shape index: {}]
  %s7 = inlined_call_operand.vmem [shape: bf16[3,32,512], index: 7, kind: input, shape index: {}]
  %s8 = inlined_call_operand.vmem [shape: f32[3,512], index: 8, kind: input, shape index: {}]
  %s9 = inlined_call_operand.vmem [shape: bf16[3,512,32], index: 9, kind: input, shape index: {}]
  %s10 = inlined_call_operand.vmem [shape: f32[3,32], index: 10, kind: input, shape index: {}]
  %s11 = inlined_call_operand.vmem [shape: f32[3,32], index: 11, kind: input, shape index: {}]
  %s12 = inlined_call_operand.vmem [shape: f32[3,32], index: 12, kind: input, shape index: {}]
  %s13 = inlined_call_operand.vmem [shape: f32[3,32], index: 13, kind: input, shape index: {}]
  %s14 = inlined_call_operand.vmem [shape: f32[3,32], index: 14, kind: input, shape index: {}]
  %s15 = inlined_call_operand.vmem [shape: f32[1,32], index: 15, kind: input, shape index: {}]
  %s16 = inlined_call_operand.vmem [shape: f32[1,32], index: 16, kind: input, shape index: {}]
  %s17 = inlined_call_operand.vmem [shape: bf16[32,16], index: 17, kind: input, shape index: {}]
  %s18 = inlined_call_operand.vmem [shape: f32[1,16], index: 18, kind: input, shape index: {}]
  %s19 = inlined_call_operand.hbm [shape: f32[8,16], index: 19, kind: output, shape index: {}]
  %s20 = sld [smem:[#allocation0]]
  $region86: #{tpu_custom_call.1} parent=0
    _
  %s22 = ssub.s32 1, %s20
  %s23 = scalar_select 0, %s22, %s20
  $region1: #{tpu_custom_call.1} parent=0
    #allocation2 [shape = 'u8[4096]{0}', space=vmem, size = 0x1000, scoped, tag = 'output window, operand 0, single buffered']
    #allocation3 [shape = 's32[1]{0}', space=sflag, size = 0x4, scoped, tag = 'scoped memory for tpu_custom_call.1']
    %24 = vsyncpa [#allocation3], 0
    // Predicated region
    $region2: #{tpu_custom_call.1} parent=1 // pred_check
      _
    $region3: #{tpu_custom_call.1} parent=1 // pred_check_branch
      %26 = sbr.rel (0) target = $region5
    $region4: #{tpu_custom_call.1} parent=1 // pred_region
      _
    $region5: #{tpu_custom_call.1} parent=1 // pred_fallthru
      _
    // Predicated region
    $region6: #{tpu_custom_call.1} parent=1 // pred_check
      _
    $region7: #{tpu_custom_call.1} parent=1 // pred_check_branch
      %28 = sbr.rel (0) target = $region9
    $region8: #{tpu_custom_call.1} parent=1 // pred_region
      _
    $region9: #{tpu_custom_call.1} parent=1 // pred_fallthru
      _
    // Predicated region
    $region10: #{tpu_custom_call.1} parent=1 // pred_check
      _
    $region11: #{tpu_custom_call.1} parent=1 // pred_check_branch
      %30 = sbr.rel (0) target = $region13
    $region12: #{tpu_custom_call.1} parent=1 // pred_region
      _
    $region13: #{tpu_custom_call.1} parent=1 // pred_fallthru
      _
    // Predicated region
    $region14: #{tpu_custom_call.1} parent=1 // pred_check
      _
    $region15: #{tpu_custom_call.1} parent=1 // pred_check_branch
      %32 = sbr.rel (0) target = $region17
    $region16: #{tpu_custom_call.1} parent=1 // pred_region
      _
    $region17: #{tpu_custom_call.1} parent=1 // pred_fallthru
      _
    // Predicated region
    $region18: #{tpu_custom_call.1} parent=1 // pred_check
      _
    $region19: #{tpu_custom_call.1} parent=1 // pred_check_branch
      %34 = sbr.rel (0) target = $region21
    $region20: #{tpu_custom_call.1} parent=1 // pred_region
      _
    $region21: #{tpu_custom_call.1} parent=1 // pred_fallthru
      _
    // Predicated region
    $region22: #{tpu_custom_call.1} parent=1 // pred_check
      _
    $region23: #{tpu_custom_call.1} parent=1 // pred_check_branch
      %36 = sbr.rel (0) target = $region25
    $region24: #{tpu_custom_call.1} parent=1 // pred_region
      _
    $region25: #{tpu_custom_call.1} parent=1 // pred_fallthru
      _
    // Predicated region
    $region26: #{tpu_custom_call.1} parent=1 // pred_check
      _
    $region27: #{tpu_custom_call.1} parent=1 // pred_check_branch
      %38 = sbr.rel (0) target = $region29
    $region28: #{tpu_custom_call.1} parent=1 // pred_region
      _
    $region29: #{tpu_custom_call.1} parent=1 // pred_fallthru
      _
    // Predicated region
    $region30: #{tpu_custom_call.1} parent=1 // pred_check
      _
    $region31: #{tpu_custom_call.1} parent=1 // pred_check_branch
      %40 = sbr.rel (0) target = $region33
    $region32: #{tpu_custom_call.1} parent=1 // pred_region
      _
    $region33: #{tpu_custom_call.1} parent=1 // pred_fallthru
      _
    // Predicated region
    $region34: #{tpu_custom_call.1} parent=1 // pred_check
      _
    $region35: #{tpu_custom_call.1} parent=1 // pred_check_branch
      %42 = sbr.rel (0) target = $region37
    $region36: #{tpu_custom_call.1} parent=1 // pred_region
      _
    $region37: #{tpu_custom_call.1} parent=1 // pred_fallthru
      _
    // Predicated region
    $region38: #{tpu_custom_call.1} parent=1 // pred_check
      _
    $region39: #{tpu_custom_call.1} parent=1 // pred_check_branch
      %44 = sbr.rel (0) target = $region41
    $region40: #{tpu_custom_call.1} parent=1 // pred_region
      _
    $region41: #{tpu_custom_call.1} parent=1 // pred_fallthru
      _
    // Predicated region
    $region42: #{tpu_custom_call.1} parent=1 // pred_check
      _
    $region43: #{tpu_custom_call.1} parent=1 // pred_check_branch
      %46 = sbr.rel (0) target = $region45
    $region44: #{tpu_custom_call.1} parent=1 // pred_region
      _
    $region45: #{tpu_custom_call.1} parent=1 // pred_fallthru
      _
    // Predicated region
    $region46: #{tpu_custom_call.1} parent=1 // pred_check
      _
    $region47: #{tpu_custom_call.1} parent=1 // pred_check_branch
      %48 = sbr.rel (0) target = $region49
    $region48: #{tpu_custom_call.1} parent=1 // pred_region
      _
    $region49: #{tpu_custom_call.1} parent=1 // pred_fallthru
      _
    // Predicated region
    $region50: #{tpu_custom_call.1} parent=1 // pred_check
      _
    $region51: #{tpu_custom_call.1} parent=1 // pred_check_branch
      %50 = sbr.rel (0) target = $region53
    $region52: #{tpu_custom_call.1} parent=1 // pred_region
      _
    $region53: #{tpu_custom_call.1} parent=1 // pred_fallthru
      _
    // Predicated region
    $region54: #{tpu_custom_call.1} parent=1 // pred_check
      _
    $region55: #{tpu_custom_call.1} parent=1 // pred_check_branch
      %52 = sbr.rel (0) target = $region57
    $region56: #{tpu_custom_call.1} parent=1 // pred_region
      _
    $region57: #{tpu_custom_call.1} parent=1 // pred_fallthru
      _
    // Predicated region
    $region58: #{tpu_custom_call.1} parent=1 // pred_check
      _
    $region59: #{tpu_custom_call.1} parent=1 // pred_check_branch
      %54 = sbr.rel (0) target = $region61
    $region60: #{tpu_custom_call.1} parent=1 // pred_region
      _
    $region61: #{tpu_custom_call.1} parent=1 // pred_fallthru
      _
    // Predicated region
    $region62: #{tpu_custom_call.1} parent=1 // pred_check
      _
    $region63: #{tpu_custom_call.1} parent=1 // pred_check_branch
      %56 = sbr.rel (0) target = $region65
    $region64: #{tpu_custom_call.1} parent=1 // pred_region
      _
    $region65: #{tpu_custom_call.1} parent=1 // pred_fallthru
      _
    // Predicated region
    $region66: #{tpu_custom_call.1} parent=1 // pred_check
      _
    $region67: #{tpu_custom_call.1} parent=1 // pred_check_branch
      %58 = sbr.rel (0) target = $region69
    $region68: #{tpu_custom_call.1} parent=1 // pred_region
      _
    $region69: #{tpu_custom_call.1} parent=1 // pred_fallthru
      _
    // Predicated region
    $region70: #{tpu_custom_call.1} parent=1 // pred_check
      _
    $region71: #{tpu_custom_call.1} parent=1 // pred_check_branch
      %60 = sbr.rel (0) target = $region73
    $region72: #{tpu_custom_call.1} parent=1 // pred_region
      _
    $region73: #{tpu_custom_call.1} parent=1 // pred_fallthru
      _
    // Predicated region
    $region74: #{tpu_custom_call.1} parent=1 // pred_check
      _
    $region75: #{tpu_custom_call.1} parent=1 // pred_check_branch
      %62 = sbr.rel (0) target = $region77
    $region76: #{tpu_custom_call.1} parent=1 // pred_region
      _
    $region77: #{tpu_custom_call.1} parent=1 // pred_fallthru
      _
    %v64 = vld [vmem:[%s0] sm:$0xff]
    %v65 = vpack.c.bf16 %v64, %v64
    %v66 = vld [vmem:[%s1] sm:$0xf]
    %v67 = vld [vmem:[%s1 + $0x4] sm:$0xf]
    %v68 = vld [vmem:[%s2] sm:$0x1]
    %v70 = vlaneseq
    %v71 = vshrl.u32 %v70, 7
    %v72 = vsub.s32 0, %v71
    %v73 = vrot.slane %v68, %v72
    %v77 = vunpack.c.l.b16 %v66
    %v78 = vunpack.c.l.b16 %v67
    %v79 = vpack.c.b16 %v78, %v77
    %vm81 = vcmask 130048
    %v83 = vsel %vm81, %v65, 0
    %85 = vmatprep.subr.bf16.mxu0 0
    %86 = vmatpush1.bf16.msra.mxu0 %v79
    %87 = vmatprep.subr.bf16.mxu0 0
    %88 = vmatpush1.bf16.msra.mxu0 0
    %89 = vmatprep.subr.bf16.mxu0 0
    %90 = vmatpush1.bf16.msra.mxu0 0
    %91 = vmatprep.subr.bf16.mxu0 0
    %92 = vmatpush1.bf16.msra.mxu0 0
    %93 = vmatprep.subr.bf16.mxu0 0
    %94 = vmatpush1.bf16.msra.mxu0 0
    %95 = vmatprep.subr.bf16.mxu0 0
    %96 = vmatpush1.bf16.msra.mxu0 0
    %97 = vmatprep.subr.bf16.mxu0 0
    %98 = vmatpush1.bf16.msra.mxu0 0
    %99 = vmatprep.subr.bf16.mxu0 0
    %100 = vmatpush1.bf16.msra.mxu0 0
    %101 = vmatprep.subr.bf16.mxu0 0
    %102 = vmatpush1.bf16.msra.mxu0 0
    %103 = vmatprep.subr.bf16.mxu0 0
    %104 = vmatpush1.bf16.msra.mxu0 0
    %105 = vmatprep.subr.bf16.mxu0 0
    %106 = vmatpush1.bf16.msra.mxu0 0
    %107 = vmatprep.subr.bf16.mxu0 0
    %108 = vmatpush1.bf16.msra.mxu0 0
    %109 = vmatprep.subr.bf16.mxu0 0
    %110 = vmatpush1.bf16.msra.mxu0 0
    %111 = vmatprep.subr.bf16.mxu0 0
    %112 = vmatpush1.bf16.msra.mxu0 0
    %113 = vmatprep.subr.bf16.mxu0 0
    %114 = vmatpush1.bf16.msra.mxu0 0
    %115 = vmatprep.subr.bf16.mxu0 0
    %116 = vmatpush1.bf16.msra.mxu0 0
    %117 = vmatprep.mubr.bf16.mxu0 0
    %118 = vmatmul.mubr.bf16.gmra.mrb[0].mxu0 %v83
    %v119 = vpop.f32.mrb[0].mxu0
    %v120 = vadd.f32 %v73, %v119
    %v121 = vpop.f32.mrb[0].mxu0
    %v122 = vpop.f32.mrb[0].mxu0
    %v123 = vpop.f32.mrb[0].mxu0
    %124 = vdwg.mxu0
    %v125 = vpack.c.bf16 %v120, %v120
    %v126 = vld [vmem:[%s3] sm:$0xf]
    %v127 = vld [vmem:[%s3 + $0x4] sm:$0xf]
    %v128 = vld [vmem:[%s3 + $0x8] sm:$0xf]
    %v129 = vld [vmem:[%s3 + $0xc] sm:$0xf]
    %v130 = vld [vmem:[%s5] sm:$0x1]
    %v131 = vlaneseq
    %v132 = vshrl.u32 %v131, 7
    %v133 = vsub.s32 0, %v132
    %v134 = vrot.slane %v130, %v133
    %v139 = vunpack.c.l.b16 %v126
    %v140 = vunpack.c.l.b16 %v127
    %v141 = vunpack.c.l.b16 %v128
    %v142 = vunpack.c.l.b16 %v129
    %v143 = vpack.c.b16 %v140, %v139
    %v144 = vpack.c.b16 %v142, %v141
    %vm147 = vcmask 261120
    %v149 = vsel %vm147, %v125, 0
    %151 = vmatprep.subr.bf16.mxu0 0
    %152 = vmatpush1.bf16.msra.mxu0 %v143
    %153 = vmatprep.subr.bf16.mxu0 0
    %154 = vmatpush1.bf16.msra.mxu0 %v144
    %155 = vmatprep.subr.bf16.mxu0 0
    %156 = vmatpush1.bf16.msra.mxu0 0
    %157 = vmatprep.subr.bf16.mxu0 0
    %158 = vmatpush1.bf16.msra.mxu0 0
    %159 = vmatprep.subr.bf16.mxu0 0
    %160 = vmatpush1.bf16.msra.mxu0 0
    %161 = vmatprep.subr.bf16.mxu0 0
    %162 = vmatpush1.bf16.msra.mxu0 0
    %163 = vmatprep.subr.bf16.mxu0 0
    %164 = vmatpush1.bf16.msra.mxu0 0
    %165 = vmatprep.subr.bf16.mxu0 0
    %166 = vmatpush1.bf16.msra.mxu0 0
    %167 = vmatprep.subr.bf16.mxu0 0
    %168 = vmatpush1.bf16.msra.mxu0 0
    %169 = vmatprep.subr.bf16.mxu0 0
    %170 = vmatpush1.bf16.msra.mxu0 0
    %171 = vmatprep.subr.bf16.mxu0 0
    %172 = vmatpush1.bf16.msra.mxu0 0
    %173 = vmatprep.subr.bf16.mxu0 0
    %174 = vmatpush1.bf16.msra.mxu0 0
    %175 = vmatprep.subr.bf16.mxu0 0
    %176 = vmatpush1.bf16.msra.mxu0 0
    %177 = vmatprep.subr.bf16.mxu0 0
    %178 = vmatpush1.bf16.msra.mxu0 0
    %179 = vmatprep.subr.bf16.mxu0 0
    %180 = vmatpush1.bf16.msra.mxu0 0
    %181 = vmatprep.subr.bf16.mxu0 0
    %182 = vmatpush1.bf16.msra.mxu0 0
    %183 = vmatprep.mubr.bf16.mxu0 0
    %184 = vmatmul.mubr.bf16.gmra.mrb[0].mxu0 %v149
    %v185 = vpop.f32.mrb[0].mxu0
    %v186 = vadd.f32 %v134, %v185
    %v187 = vpop.f32.mrb[0].mxu0
    %v188 = vpop.f32.mrb[0].mxu0
    %v189 = vpop.f32.mrb[0].mxu0
    %190 = vdwg.mxu0
    %v191 = vpack.c.bf16 %v186, %v186
    %v192 = vld [vmem:[%s4] sm:$0xf]
    %v193 = vld [vmem:[%s4 + $0x4] sm:$0xf]
    %v194 = vld [vmem:[%s4 + $0x8] sm:$0xf]
    %v195 = vld [vmem:[%s4 + $0xc] sm:$0xf]
    %v196 = vld [vmem:[%s6] sm:$0x1]
    %v197 = vlaneseq
    %v198 = vshrl.u32 %v197, 7
    %v199 = vsub.s32 0, %v198
    %v200 = vrot.slane %v196, %v199
    %v205 = vunpack.c.l.b16 %v192
    %v206 = vunpack.c.l.b16 %v193
    %v207 = vunpack.c.l.b16 %v194
    %v208 = vunpack.c.l.b16 %v195
    %v209 = vpack.c.b16 %v206, %v205
    %v210 = vpack.c.b16 %v208, %v207
    %v214 = vsel %vm147, %v191, 0
    %216 = vmatprep.subr.bf16.mxu0 0
    %217 = vmatpush1.bf16.msra.mxu0 %v209
    %218 = vmatprep.subr.bf16.mxu0 0
    %219 = vmatpush1.bf16.msra.mxu0 %v210
    %220 = vmatprep.subr.bf16.mxu0 0
    %221 = vmatpush1.bf16.msra.mxu0 0
    %222 = vmatprep.subr.bf16.mxu0 0
    %223 = vmatpush1.bf16.msra.mxu0 0
    %224 = vmatprep.subr.bf16.mxu0 0
    %225 = vmatpush1.bf16.msra.mxu0 0
    %226 = vmatprep.subr.bf16.mxu0 0
    %227 = vmatpush1.bf16.msra.mxu0 0
    %228 = vmatprep.subr.bf16.mxu0 0
    %229 = vmatpush1.bf16.msra.mxu0 0
    %230 = vmatprep.subr.bf16.mxu0 0
    %231 = vmatpush1.bf16.msra.mxu0 0
    %232 = vmatprep.subr.bf16.mxu0 0
    %233 = vmatpush1.bf16.msra.mxu0 0
    %234 = vmatprep.subr.bf16.mxu0 0
    %235 = vmatpush1.bf16.msra.mxu0 0
    %236 = vmatprep.subr.bf16.mxu0 0
    %237 = vmatpush1.bf16.msra.mxu0 0
    %238 = vmatprep.subr.bf16.mxu0 0
    %239 = vmatpush1.bf16.msra.mxu0 0
    %240 = vmatprep.subr.bf16.mxu0 0
    %241 = vmatpush1.bf16.msra.mxu0 0
    %242 = vmatprep.subr.bf16.mxu0 0
    %243 = vmatpush1.bf16.msra.mxu0 0
    %244 = vmatprep.subr.bf16.mxu0 0
    %245 = vmatpush1.bf16.msra.mxu0 0
    %246 = vmatprep.subr.bf16.mxu0 0
    %247 = vmatpush1.bf16.msra.mxu0 0
    %248 = vmatprep.mubr.bf16.mxu0 0
    %249 = vmatmul.mubr.bf16.gmra.mrb[0].mxu0 %v214
    %v250 = vpop.f32.mrb[0].mxu0
    %v251 = vadd.f32 %v200, %v250
    %v252 = vpop.f32.mrb[0].mxu0
    %v253 = vpop.f32.mrb[0].mxu0
    %v254 = vpop.f32.mrb[0].mxu0
    %255 = vdwg.mxu0
    %v256 = vadd.f32 %v120, %v251
    %v257 = vld [vmem:[%s11] sm:$0x1]
    %v258 = vld [vmem:[%s12] sm:$0x1]
    %v259 = vsel %vm147, %v256, 0.0
    %260 = vadd.xlane.f32.xlu0 %v259
    %v261 = vpop.xlane.xlu0 %260
    %v262 = vrcp.pop 32.0
    %v263 = vmul.f32 %v261, %v262
    %v264 = vsub.f32 %v256, %v263
    %v265 = vmul.f32 %v264, %v264
    %v266 = vsel %vm147, %v265, 0.0
    %267 = vadd.xlane.f32.xlu0 %v266
    %v268 = vpop.xlane.xlu0 %267
    %v269 = vmul.f32 %v268, %v262
    %v270 = vadd.f32 %v269, 1e-05
    %v271 = vrsqrt.pop %v270
    %v272 = vmul.f32 %v264, %v271
    %v273 = vlaneseq
    %v274 = vshrl.u32 %v273, 7
    %v275 = vsub.s32 0, %v274
    %v276 = vrot.slane %v257, %v275
    %v277 = vmul.f32 %v272, %v276
    %v278 = vlaneseq
    %v279 = vshrl.u32 %v278, 7
    %v280 = vsub.s32 0, %v279
    %v281 = vrot.slane %v258, %v280
    %v282 = vadd.f32 %v277, %v281
    %v283 = vpack.c.bf16 %v282, %v282
    %v284 = vld [vmem:[%s7] sm:$0xff]
    %v285 = vld [vmem:[%s7 + $0x8] sm:$0xff]
    %v286 = vld [vmem:[%s7 + $0x10] sm:$0xff]
    %v287 = vld [vmem:[%s7 + $0x18] sm:$0xff]
    %v288 = vld [vmem:[%s7 + $0x20] sm:$0xff]
    %v289 = vld [vmem:[%s7 + $0x28] sm:$0xff]
    %v290 = vld [vmem:[%s7 + $0x30] sm:$0xff]
    %v291 = vld [vmem:[%s7 + $0x38] sm:$0xff]
    %v292 = vld [vmem:[%s8] ss:$4 sm:$0xf]
    %v294 = vlaneseq
    %v295 = vshrl.u32 %v294, 7
    %v296 = vsub.s32 0, %v295
    %v297 = vrot.slane %v292, %v296
    %v298 = vlaneseq
    %v299 = vshrl.u32 %v298, 7
    %v300 = vsub.s32 1, %v299
    %v301 = vrot.slane %v292, %v300
    %v302 = vlaneseq
    %v303 = vshrl.u32 %v302, 7
    %v304 = vsub.s32 2, %v303
    %v305 = vrot.slane %v292, %v304
    %v306 = vlaneseq
    %v307 = vshrl.u32 %v306, 7
    %v308 = vsub.s32 3, %v307
    %v309 = vrot.slane %v292, %v308
    %v322 = vunpack.c.l.b16 %v284
    %v323 = vunpack.c.h.b16 %v284
    %v324 = vunpack.c.l.b16 %v285
    %v325 = vunpack.c.h.b16 %v285
    %v326 = vunpack.c.l.b16 %v286
    %v327 = vunpack.c.h.b16 %v286
    %v328 = vunpack.c.l.b16 %v287
    %v329 = vunpack.c.h.b16 %v287
    %v330 = vunpack.c.l.b16 %v288
    %v331 = vunpack.c.h.b16 %v288
    %v332 = vunpack.c.l.b16 %v289
    %v333 = vunpack.c.h.b16 %v289
    %v334 = vunpack.c.l.b16 %v290
    %v335 = vunpack.c.h.b16 %v290
    %v336 = vunpack.c.l.b16 %v291
    %v337 = vunpack.c.h.b16 %v291
    %v338 = vpack.c.b16 %v326, %v322
    %v339 = vpack.c.b16 %v327, %v323
    %v340 = vpack.c.b16 %v328, %v324
    %v341 = vpack.c.b16 %v329, %v325
    %v342 = vpack.c.b16 %v334, %v330
    %v343 = vpack.c.b16 %v335, %v331
    %v344 = vpack.c.b16 %v336, %v332
    %v345 = vpack.c.b16 %v337, %v333
    %v355 = vsel %vm147, %v283, 0
    %357 = vmatprep.subr.bf16.mxu0 %v339
    %358 = vmatpush1.bf16.msra.mxu0 %v338
    %359 = vmatprep.subr.bf16.mxu0 %v343
    %360 = vmatpush1.bf16.msra.mxu0 %v342
    %361 = vmatprep.subr.bf16.mxu0 0
    %362 = vmatpush1.bf16.msra.mxu0 0
    %363 = vmatprep.subr.bf16.mxu0 0
    %364 = vmatpush1.bf16.msra.mxu0 0
    %365 = vmatprep.subr.bf16.mxu0 0
    %366 = vmatpush1.bf16.msra.mxu0 0
    %367 = vmatprep.subr.bf16.mxu0 0
    %368 = vmatpush1.bf16.msra.mxu0 0
    %369 = vmatprep.subr.bf16.mxu0 0
    %370 = vmatpush1.bf16.msra.mxu0 0
    %371 = vmatprep.subr.bf16.mxu0 0
    %372 = vmatpush1.bf16.msra.mxu0 0
    %373 = vmatprep.subr.bf16.mxu0 0
    %374 = vmatpush1.bf16.msra.mxu0 0
    %375 = vmatprep.subr.bf16.mxu0 0
    %376 = vmatpush1.bf16.msra.mxu0 0
    %377 = vmatprep.subr.bf16.mxu0 0
    %378 = vmatpush1.bf16.msra.mxu0 0
    %379 = vmatprep.subr.bf16.mxu0 0
    %380 = vmatpush1.bf16.msra.mxu0 0
    %381 = vmatprep.subr.bf16.mxu0 0
    %382 = vmatpush1.bf16.msra.mxu0 0
    %383 = vmatprep.subr.bf16.mxu0 0
    %384 = vmatpush1.bf16.msra.mxu0 0
    %385 = vmatprep.subr.bf16.mxu0 0
    %386 = vmatpush1.bf16.msra.mxu0 0
    %387 = vmatprep.subr.bf16.mxu0 0
    %388 = vmatpush1.bf16.msra.mxu0 0
    %389 = vmatprep.mubr.bf16.mxu0 0
    %390 = vmatmul.mubr.bf16.gmra.mrb[0].mxu0 %v355
    %v391 = vpop.f32.mrb[0].mxu0
    %v392 = vadd.f32 %v297, %v391
    %v393 = vpop.f32.mrb[0].mxu0
    %v394 = vadd.f32 %v301, %v393
    %v395 = vpop.f32.mrb[0].mxu0
    %v396 = vpop.f32.mrb[0].mxu0
    %397 = vdwg.mxu0
    %398 = vmatprep.subr.bf16.mxu0 %v341
    %399 = vmatpush1.bf16.msra.mxu0 %v340
    %400 = vmatprep.subr.bf16.mxu0 %v345
    %401 = vmatpush1.bf16.msra.mxu0 %v344
    %402 = vmatprep.subr.bf16.mxu0 0
    %403 = vmatpush1.bf16.msra.mxu0 0
    %404 = vmatprep.subr.bf16.mxu0 0
    %405 = vmatpush1.bf16.msra.mxu0 0
    %406 = vmatprep.subr.bf16.mxu0 0
    %407 = vmatpush1.bf16.msra.mxu0 0
    %408 = vmatprep.subr.bf16.mxu0 0
    %409 = vmatpush1.bf16.msra.mxu0 0
    %410 = vmatprep.subr.bf16.mxu0 0
    %411 = vmatpush1.bf16.msra.mxu0 0
    %412 = vmatprep.subr.bf16.mxu0 0
    %413 = vmatpush1.bf16.msra.mxu0 0
    %414 = vmatprep.subr.bf16.mxu0 0
    %415 = vmatpush1.bf16.msra.mxu0 0
    %416 = vmatprep.subr.bf16.mxu0 0
    %417 = vmatpush1.bf16.msra.mxu0 0
    %418 = vmatprep.subr.bf16.mxu0 0
    %419 = vmatpush1.bf16.msra.mxu0 0
    %420 = vmatprep.subr.bf16.mxu0 0
    %421 = vmatpush1.bf16.msra.mxu0 0
    %422 = vmatprep.subr.bf16.mxu0 0
    %423 = vmatpush1.bf16.msra.mxu0 0
    %424 = vmatprep.subr.bf16.mxu0 0
    %425 = vmatpush1.bf16.msra.mxu0 0
    %426 = vmatprep.subr.bf16.mxu0 0
    %427 = vmatpush1.bf16.msra.mxu0 0
    %428 = vmatprep.subr.bf16.mxu0 0
    %429 = vmatpush1.bf16.msra.mxu0 0
    %430 = vmatprep.mubr.bf16.mxu0 0
    %431 = vmatmul.mubr.bf16.gmra.mrb[0].mxu0 %v355
    %v432 = vpop.f32.mrb[0].mxu0
    %v433 = vadd.f32 %v305, %v432
    %v434 = vpop.f32.mrb[0].mxu0
    %v435 = vadd.f32 %v309, %v434
    %v436 = vpop.f32.mrb[0].mxu0
    %v437 = vpop.f32.mrb[0].mxu0
    %438 = vdwg.mxu0
    %v439 = vmul.f32 %v392, 0.5
    %v440 = vmul.f32 %v394, 0.5
    %v441 = vmul.f32 %v433, 0.5
    %v442 = vmul.f32 %v435, 0.5
    %v443 = vmul.f32 %v392, 0.044715
    %v444 = vmul.f32 %v394, 0.044715
    %v445 = vmul.f32 %v433, 0.044715
    %v446 = vmul.f32 %v435, 0.044715
    %v447 = vmul.f32 %v443, %v392
    %v448 = vmul.f32 %v444, %v394
    %v449 = vmul.f32 %v445, %v433
    %v450 = vmul.f32 %v446, %v435
    %v451 = vmul.f32 %v447, %v392
    %v452 = vmul.f32 %v448, %v394
    %v453 = vmul.f32 %v449, %v433
    %v454 = vmul.f32 %v450, %v435
    %v455 = vadd.f32 %v392, %v451
    %v456 = vadd.f32 %v394, %v452
    %v457 = vadd.f32 %v433, %v453
    %v458 = vadd.f32 %v435, %v454
    %v459 = vmul.f32 %v455, 0.7978846
    %v460 = vmul.f32 %v456, 0.7978846
    %v461 = vmul.f32 %v457, 0.7978846
    %v462 = vmul.f32 %v458, 0.7978846
    %v463 = vtanh.pop %v459
    %v464 = vtanh.pop %v460
    %v465 = vtanh.pop %v461
    %v466 = vtanh.pop %v462
    %v467 = vadd.f32 %v463, 1.0
    %v468 = vadd.f32 %v464, 1.0
    %v469 = vadd.f32 %v465, 1.0
    %v470 = vadd.f32 %v466, 1.0
    %v471 = vmul.f32 %v439, %v467
    %v472 = vmul.f32 %v440, %v468
    %v473 = vmul.f32 %v441, %v469
    %v474 = vmul.f32 %v442, %v470
    %v475 = vpack.c.bf16 %v471, %v471
    %v476 = vpack.c.bf16 %v472, %v472
    %v477 = vpack.c.bf16 %v473, %v473
    %v478 = vpack.c.bf16 %v474, %v474
    %v479 = vld [vmem:[%s9] sm:$0xf]
    %v480 = vld [vmem:[%s9 + $0x4] sm:$0xf]
    %v481 = vld [vmem:[%s9 + $0x8] sm:$0xf]
    %v482 = vld [vmem:[%s9 + $0xc] sm:$0xf]
    %v483 = vld [vmem:[%s9 + $0x10] sm:$0xf]
    %v484 = vld [vmem:[%s9 + $0x14] sm:$0xf]
    %v485 = vld [vmem:[%s9 + $0x18] sm:$0xf]
    %v486 = vld [vmem:[%s9 + $0x1c] sm:$0xf]
    %v487 = vld [vmem:[%s9 + $0x20] sm:$0xf]
    %v488 = vld [vmem:[%s9 + $0x24] sm:$0xf]
    %v489 = vld [vmem:[%s9 + $0x28] sm:$0xf]
    %v490 = vld [vmem:[%s9 + $0x2c] sm:$0xf]
    %v491 = vld [vmem:[%s9 + $0x30] sm:$0xf]
    %v492 = vld [vmem:[%s9 + $0x34] sm:$0xf]
    %v493 = vld [vmem:[%s9 + $0x38] sm:$0xf]
    %v494 = vld [vmem:[%s9 + $0x3c] sm:$0xf]
    %v495 = vld [vmem:[%s9 + $0x40] sm:$0xf]
    %v496 = vld [vmem:[%s9 + $0x44] sm:$0xf]
    %v497 = vld [vmem:[%s9 + $0x48] sm:$0xf]
    %v498 = vld [vmem:[%s9 + $0x4c] sm:$0xf]
    %v499 = vld [vmem:[%s9 + $0x50] sm:$0xf]
    %v500 = vld [vmem:[%s9 + $0x54] sm:$0xf]
    %v501 = vld [vmem:[%s9 + $0x58] sm:$0xf]
    %v502 = vld [vmem:[%s9 + $0x5c] sm:$0xf]
    %v503 = vld [vmem:[%s9 + $0x60] sm:$0xf]
    %v504 = vld [vmem:[%s9 + $0x64] sm:$0xf]
    %v505 = vld [vmem:[%s9 + $0x68] sm:$0xf]
    %v506 = vld [vmem:[%s9 + $0x6c] sm:$0xf]
    %v507 = vld [vmem:[%s9 + $0x70] sm:$0xf]
    %v508 = vld [vmem:[%s9 + $0x74] sm:$0xf]
    %v509 = vld [vmem:[%s9 + $0x78] sm:$0xf]
    %v510 = vld [vmem:[%s9 + $0x7c] sm:$0xf]
    %v511 = vld [vmem:[%s9 + $0x80] sm:$0xf]
    %v512 = vld [vmem:[%s9 + $0x84] sm:$0xf]
    %v513 = vld [vmem:[%s9 + $0x88] sm:$0xf]
    %v514 = vld [vmem:[%s9 + $0x8c] sm:$0xf]
    %v515 = vld [vmem:[%s9 + $0x90] sm:$0xf]
    %v516 = vld [vmem:[%s9 + $0x94] sm:$0xf]
    %v517 = vld [vmem:[%s9 + $0x98] sm:$0xf]
    %v518 = vld [vmem:[%s9 + $0x9c] sm:$0xf]
    %v519 = vld [vmem:[%s9 + $0xa0] sm:$0xf]
    %v520 = vld [vmem:[%s9 + $0xa4] sm:$0xf]
    %v521 = vld [vmem:[%s9 + $0xa8] sm:$0xf]
    %v522 = vld [vmem:[%s9 + $0xac] sm:$0xf]
    %v523 = vld [vmem:[%s9 + $0xb0] sm:$0xf]
    %v524 = vld [vmem:[%s9 + $0xb4] sm:$0xf]
    %v525 = vld [vmem:[%s9 + $0xb8] sm:$0xf]
    %v526 = vld [vmem:[%s9 + $0xbc] sm:$0xf]
    %v527 = vld [vmem:[%s9 + $0xc0] sm:$0xf]
    %v528 = vld [vmem:[%s9 + $0xc4] sm:$0xf]
    %v529 = vld [vmem:[%s9 + $0xc8] sm:$0xf]
    %v530 = vld [vmem:[%s9 + $0xcc] sm:$0xf]
    %v531 = vld [vmem:[%s9 + $0xd0] sm:$0xf]
    %v532 = vld [vmem:[%s9 + $0xd4] sm:$0xf]
    %v533 = vld [vmem:[%s9 + $0xd8] sm:$0xf]
    %v534 = vld [vmem:[%s9 + $0xdc] sm:$0xf]
    %v535 = vld [vmem:[%s9 + $0xe0] sm:$0xf]
    %v536 = vld [vmem:[%s9 + $0xe4] sm:$0xf]
    %v537 = vld [vmem:[%s9 + $0xe8] sm:$0xf]
    %v538 = vld [vmem:[%s9 + $0xec] sm:$0xf]
    %v539 = vld [vmem:[%s9 + $0xf0] sm:$0xf]
    %v540 = vld [vmem:[%s9 + $0xf4] sm:$0xf]
    %v541 = vld [vmem:[%s9 + $0xf8] sm:$0xf]
    %v542 = vld [vmem:[%s9 + $0xfc] sm:$0xf]
    %v543 = vld [vmem:[%s10] sm:$0x1]
    %v544 = vlaneseq
    %v545 = vshrl.u32 %v544, 7
    %v546 = vsub.s32 0, %v545
    %v547 = vrot.slane %v543, %v546
    %v612 = vunpack.c.l.b16 %v479
    %v613 = vunpack.c.l.b16 %v480
    %v614 = vunpack.c.l.b16 %v481
    %v615 = vunpack.c.l.b16 %v482
    %v616 = vunpack.c.l.b16 %v483
    %v617 = vunpack.c.l.b16 %v484
    %v618 = vunpack.c.l.b16 %v485
    %v619 = vunpack.c.l.b16 %v486
    %v620 = vunpack.c.l.b16 %v487
    %v621 = vunpack.c.l.b16 %v488
    %v622 = vunpack.c.l.b16 %v489
    %v623 = vunpack.c.l.b16 %v490
    %v624 = vunpack.c.l.b16 %v491
    %v625 = vunpack.c.l.b16 %v492
    %v626 = vunpack.c.l.b16 %v493
    %v627 = vunpack.c.l.b16 %v494
    %v628 = vunpack.c.l.b16 %v495
    %v629 = vunpack.c.l.b16 %v496
    %v630 = vunpack.c.l.b16 %v497
    %v631 = vunpack.c.l.b16 %v498
    %v632 = vunpack.c.l.b16 %v499
    %v633 = vunpack.c.l.b16 %v500
    %v634 = vunpack.c.l.b16 %v501
    %v635 = vunpack.c.l.b16 %v502
    %v636 = vunpack.c.l.b16 %v503
    %v637 = vunpack.c.l.b16 %v504
    %v638 = vunpack.c.l.b16 %v505
    %v639 = vunpack.c.l.b16 %v506
    %v640 = vunpack.c.l.b16 %v507
    %v641 = vunpack.c.l.b16 %v508
    %v642 = vunpack.c.l.b16 %v509
    %v643 = vunpack.c.l.b16 %v510
    %v644 = vunpack.c.l.b16 %v511
    %v645 = vunpack.c.l.b16 %v512
    %v646 = vunpack.c.l.b16 %v513
    %v647 = vunpack.c.l.b16 %v514
    %v648 = vunpack.c.l.b16 %v515
    %v649 = vunpack.c.l.b16 %v516
    %v650 = vunpack.c.l.b16 %v517
    %v651 = vunpack.c.l.b16 %v518
    %v652 = vunpack.c.l.b16 %v519
    %v653 = vunpack.c.l.b16 %v520
    %v654 = vunpack.c.l.b16 %v521
    %v655 = vunpack.c.l.b16 %v522
    %v656 = vunpack.c.l.b16 %v523
    %v657 = vunpack.c.l.b16 %v524
    %v658 = vunpack.c.l.b16 %v525
    %v659 = vunpack.c.l.b16 %v526
    %v660 = vunpack.c.l.b16 %v527
    %v661 = vunpack.c.l.b16 %v528
    %v662 = vunpack.c.l.b16 %v529
    %v663 = vunpack.c.l.b16 %v530
    %v664 = vunpack.c.l.b16 %v531
    %v665 = vunpack.c.l.b16 %v532
    %v666 = vunpack.c.l.b16 %v533
    %v667 = vunpack.c.l.b16 %v534
    %v668 = vunpack.c.l.b16 %v535
    %v669 = vunpack.c.l.b16 %v536
    %v670 = vunpack.c.l.b16 %v537
    %v671 = vunpack.c.l.b16 %v538
    %v672 = vunpack.c.l.b16 %v539
    %v673 = vunpack.c.l.b16 %v540
    %v674 = vunpack.c.l.b16 %v541
    %v675 = vunpack.c.l.b16 %v542
    %v676 = vpack.c.b16 %v613, %v612
    %v677 = vpack.c.b16 %v615, %v614
    %v678 = vpack.c.b16 %v617, %v616
    %v679 = vpack.c.b16 %v619, %v618
    %v680 = vpack.c.b16 %v621, %v620
    %v681 = vpack.c.b16 %v623, %v622
    %v682 = vpack.c.b16 %v625, %v624
    %v683 = vpack.c.b16 %v627, %v626
    %v684 = vpack.c.b16 %v629, %v628
    %v685 = vpack.c.b16 %v631, %v630
    %v686 = vpack.c.b16 %v633, %v632
    %v687 = vpack.c.b16 %v635, %v634
    %v688 = vpack.c.b16 %v637, %v636
    %v689 = vpack.c.b16 %v639, %v638
    %v690 = vpack.c.b16 %v641, %v640
    %v691 = vpack.c.b16 %v643, %v642
    %v692 = vpack.c.b16 %v645, %v644
    %v693 = vpack.c.b16 %v647, %v646
    %v694 = vpack.c.b16 %v649, %v648
    %v695 = vpack.c.b16 %v651, %v650
    %v696 = vpack.c.b16 %v653, %v652
    %v697 = vpack.c.b16 %v655, %v654
    %v698 = vpack.c.b16 %v657, %v656
    %v699 = vpack.c.b16 %v659, %v658
    %v700 = vpack.c.b16 %v661, %v660
    %v701 = vpack.c.b16 %v663, %v662
    %v702 = vpack.c.b16 %v665, %v664
    %v703 = vpack.c.b16 %v667, %v666
    %v704 = vpack.c.b16 %v669, %v668
    %v705 = vpack.c.b16 %v671, %v670
    %v706 = vpack.c.b16 %v673, %v672
    %v707 = vpack.c.b16 %v675, %v674
    %740 = vmatprep.subr.bf16.mxu0 0
    %741 = vmatpush1.bf16.msra.mxu0 %v676
    %742 = vmatprep.subr.bf16.mxu0 0
    %743 = vmatpush1.bf16.msra.mxu0 %v677
    %744 = vmatprep.subr.bf16.mxu0 0
    %745 = vmatpush1.bf16.msra.mxu0 %v678
    %746 = vmatprep.subr.bf16.mxu0 0
    %747 = vmatpush1.bf16.msra.mxu0 %v679
    %748 = vmatprep.subr.bf16.mxu0 0
    %749 = vmatpush1.bf16.msra.mxu0 %v680
    %750 = vmatprep.subr.bf16.mxu0 0
    %751 = vmatpush1.bf16.msra.mxu0 %v681
    %752 = vmatprep.subr.bf16.mxu0 0
    %753 = vmatpush1.bf16.msra.mxu0 %v682
    %754 = vmatprep.subr.bf16.mxu0 0
    %755 = vmatpush1.bf16.msra.mxu0 %v683
    %756 = vmatprep.subr.bf16.mxu0 0
    %757 = vmatpush1.bf16.msra.mxu0 %v684
    %758 = vmatprep.subr.bf16.mxu0 0
    %759 = vmatpush1.bf16.msra.mxu0 %v685
    %760 = vmatprep.subr.bf16.mxu0 0
    %761 = vmatpush1.bf16.msra.mxu0 %v686
    %762 = vmatprep.subr.bf16.mxu0 0
    %763 = vmatpush1.bf16.msra.mxu0 %v687
    %764 = vmatprep.subr.bf16.mxu0 0
    %765 = vmatpush1.bf16.msra.mxu0 %v688
    %766 = vmatprep.subr.bf16.mxu0 0
    %767 = vmatpush1.bf16.msra.mxu0 %v689
    %768 = vmatprep.subr.bf16.mxu0 0
    %769 = vmatpush1.bf16.msra.mxu0 %v690
    %770 = vmatprep.subr.bf16.mxu0 0
    %771 = vmatpush1.bf16.msra.mxu0 %v691
    %772 = vmatprep.mubr.bf16.mxu0 %v476
    %773 = vmatmul.mubr.bf16.gmra.mrb[0].mxu0 %v475
    %v774 = vpop.f32.mrb[0].mxu0
    %v775 = vadd.f32 %v547, %v774
    %v776 = vpop.f32.mrb[0].mxu0
    %v777 = vpop.f32.mrb[0].mxu0
    %v778 = vpop.f32.mrb[0].mxu0
    %779 = vdwg.mxu0
    %780 = vmatprep.subr.bf16.mxu0 0
    %781 = vmatpush1.bf16.msra.mxu0 %v692
    %782 = vmatprep.subr.bf16.mxu0 0
    %783 = vmatpush1.bf16.msra.mxu0 %v693
    %784 = vmatprep.subr.bf16.mxu0 0
    %785 = vmatpush1.bf16.msra.mxu0 %v694
    %786 = vmatprep.subr.bf16.mxu0 0
    %787 = vmatpush1.bf16.msra.mxu0 %v695
    %788 = vmatprep.subr.bf16.mxu0 0
    %789 = vmatpush1.bf16.msra.mxu0 %v696
    %790 = vmatprep.subr.bf16.mxu0 0
    %791 = vmatpush1.bf16.msra.mxu0 %v697
    %792 = vmatprep.subr.bf16.mxu0 0
    %793 = vmatpush1.bf16.msra.mxu0 %v698
    %794 = vmatprep.subr.bf16.mxu0 0
    %795 = vmatpush1.bf16.msra.mxu0 %v699
    %796 = vmatprep.subr.bf16.mxu0 0
    %797 = vmatpush1.bf16.msra.mxu0 %v700
    %798 = vmatprep.subr.bf16.mxu0 0
    %799 = vmatpush1.bf16.msra.mxu0 %v701
    %800 = vmatprep.subr.bf16.mxu0 0
    %801 = vmatpush1.bf16.msra.mxu0 %v702
    %802 = vmatprep.subr.bf16.mxu0 0
    %803 = vmatpush1.bf16.msra.mxu0 %v703
    %804 = vmatprep.subr.bf16.mxu0 0
    %805 = vmatpush1.bf16.msra.mxu0 %v704
    %806 = vmatprep.subr.bf16.mxu0 0
    %807 = vmatpush1.bf16.msra.mxu0 %v705
    %808 = vmatprep.subr.bf16.mxu0 0
    %809 = vmatpush1.bf16.msra.mxu0 %v706
    %810 = vmatprep.subr.bf16.mxu0 0
    %811 = vmatpush1.bf16.msra.mxu0 %v707
    %812 = vmatprep.mubr.bf16.mxu0 %v478
    %813 = vmatmul.mubr.bf16.gmra.mrb[0].mxu0 %v477
    %v814 = vpop.f32.mrb[0].mxu0
    %v815 = vadd.f32 %v775, %v814
    %v816 = vpop.f32.mrb[0].mxu0
    %v817 = vpop.f32.mrb[0].mxu0
    %v818 = vpop.f32.mrb[0].mxu0
    %819 = vdwg.mxu0
    %v820 = vadd.f32 %v282, %v815
    %v821 = vld [vmem:[%s13] sm:$0x1]
    %v822 = vld [vmem:[%s14] sm:$0x1]
    %v823 = vsel %vm147, %v820, 0.0
    %824 = vadd.xlane.f32.xlu0 %v823
    %v825 = vpop.xlane.xlu0 %824
    %v826 = vmul.f32 %v825, %v262
    %v827 = vsub.f32 %v820, %v826
    %v828 = vmul.f32 %v827, %v827
    %v829 = vsel %vm147, %v828, 0.0
    %830 = vadd.xlane.f32.xlu0 %v829
    %v831 = vpop.xlane.xlu0 %830
    %v832 = vmul.f32 %v831, %v262
    %v833 = vadd.f32 %v832, 1e-05
    %v834 = vrsqrt.pop %v833
    %v835 = vmul.f32 %v827, %v834
    %v836 = vlaneseq
    %v837 = vshrl.u32 %v836, 7
    %v838 = vsub.s32 0, %v837
    %v839 = vrot.slane %v821, %v838
    %v840 = vmul.f32 %v835, %v839
    %v841 = vlaneseq
    %v842 = vshrl.u32 %v841, 7
    %v843 = vsub.s32 0, %v842
    %v844 = vrot.slane %v822, %v843
    %v845 = vadd.f32 %v840, %v844
    %v846 = vpack.c.bf16 %v845, %v845
    %s847 = scalar_lea.vmem %s3, 16
    %v848 = vld [vmem:[%s847] sm:$0xf]
    %v849 = vld [vmem:[%s847 + $0x4] sm:$0xf]
    %v850 = vld [vmem:[%s847 + $0x8] sm:$0xf]
    %v851 = vld [vmem:[%s847 + $0xc] sm:$0xf]
    %v852 = vld [vmem:[%s5 + $0x1] sm:$0x1]
    %v853 = vlaneseq
    %v854 = vshrl.u32 %v853, 7
    %v855 = vsub.s32 0, %v854
    %v856 = vrot.slane %v852, %v855
    %v861 = vunpack.c.l.b16 %v848
    %v862 = vunpack.c.l.b16 %v849
    %v863 = vunpack.c.l.b16 %v850
    %v864 = vunpack.c.l.b16 %v851
    %v865 = vpack.c.b16 %v862, %v861
    %v866 = vpack.c.b16 %v864, %v863
    %v870 = vsel %vm147, %v846, 0
    %872 = vmatprep.subr.bf16.mxu0 0
    %873 = vmatpush1.bf16.msra.mxu0 %v865
    %874 = vmatprep.subr.bf16.mxu0 0
    %875 = vmatpush1.bf16.msra.mxu0 %v866
    %876 = vmatprep.subr.bf16.mxu0 0
    %877 = vmatpush1.bf16.msra.mxu0 0
    %878 = vmatprep.subr.bf16.mxu0 0
    %879 = vmatpush1.bf16.msra.mxu0 0
    %880 = vmatprep.subr.bf16.mxu0 0
    %881 = vmatpush1.bf16.msra.mxu0 0
    %882 = vmatprep.subr.bf16.mxu0 0
    %883 = vmatpush1.bf16.msra.mxu0 0
    %884 = vmatprep.subr.bf16.mxu0 0
    %885 = vmatpush1.bf16.msra.mxu0 0
    %886 = vmatprep.subr.bf16.mxu0 0
    %887 = vmatpush1.bf16.msra.mxu0 0
    %888 = vmatprep.subr.bf16.mxu0 0
    %889 = vmatpush1.bf16.msra.mxu0 0
    %890 = vmatprep.subr.bf16.mxu0 0
    %891 = vmatpush1.bf16.msra.mxu0 0
    %892 = vmatprep.subr.bf16.mxu0 0
    %893 = vmatpush1.bf16.msra.mxu0 0
    %894 = vmatprep.subr.bf16.mxu0 0
    %895 = vmatpush1.bf16.msra.mxu0 0
    %896 = vmatprep.subr.bf16.mxu0 0
    %897 = vmatpush1.bf16.msra.mxu0 0
    %898 = vmatprep.subr.bf16.mxu0 0
    %899 = vmatpush1.bf16.msra.mxu0 0
    %900 = vmatprep.subr.bf16.mxu0 0
    %901 = vmatpush1.bf16.msra.mxu0 0
    %902 = vmatprep.subr.bf16.mxu0 0
    %903 = vmatpush1.bf16.msra.mxu0 0
    %904 = vmatprep.mubr.bf16.mxu0 0
    %905 = vmatmul.mubr.bf16.gmra.mrb[0].mxu0 %v870
    %v906 = vpop.f32.mrb[0].mxu0
    %v907 = vadd.f32 %v856, %v906
    %v908 = vpop.f32.mrb[0].mxu0
    %v909 = vpop.f32.mrb[0].mxu0
    %v910 = vpop.f32.mrb[0].mxu0
    %911 = vdwg.mxu0
    %v912 = vpack.c.bf16 %v907, %v907
    %s913 = scalar_lea.vmem %s4, 16
    %v914 = vld [vmem:[%s913] sm:$0xf]
    %v915 = vld [vmem:[%s913 + $0x4] sm:$0xf]
    %v916 = vld [vmem:[%s913 + $0x8] sm:$0xf]
    %v917 = vld [vmem:[%s913 + $0xc] sm:$0xf]
    %v918 = vld [vmem:[%s6 + $0x1] sm:$0x1]
    %v919 = vlaneseq
    %v920 = vshrl.u32 %v919, 7
    %v921 = vsub.s32 0, %v920
    %v922 = vrot.slane %v918, %v921
    %v927 = vunpack.c.l.b16 %v914
    %v928 = vunpack.c.l.b16 %v915
    %v929 = vunpack.c.l.b16 %v916
    %v930 = vunpack.c.l.b16 %v917
    %v931 = vpack.c.b16 %v928, %v927
    %v932 = vpack.c.b16 %v930, %v929
    %v936 = vsel %vm147, %v912, 0
    %938 = vmatprep.subr.bf16.mxu0 0
    %939 = vmatpush1.bf16.msra.mxu0 %v931
    %940 = vmatprep.subr.bf16.mxu0 0
    %941 = vmatpush1.bf16.msra.mxu0 %v932
    %942 = vmatprep.subr.bf16.mxu0 0
    %943 = vmatpush1.bf16.msra.mxu0 0
    %944 = vmatprep.subr.bf16.mxu0 0
    %945 = vmatpush1.bf16.msra.mxu0 0
    %946 = vmatprep.subr.bf16.mxu0 0
    %947 = vmatpush1.bf16.msra.mxu0 0
    %948 = vmatprep.subr.bf16.mxu0 0
    %949 = vmatpush1.bf16.msra.mxu0 0
    %950 = vmatprep.subr.bf16.mxu0 0
    %951 = vmatpush1.bf16.msra.mxu0 0
    %952 = vmatprep.subr.bf16.mxu0 0
    %953 = vmatpush1.bf16.msra.mxu0 0
    %954 = vmatprep.subr.bf16.mxu0 0
    %955 = vmatpush1.bf16.msra.mxu0 0
    %956 = vmatprep.subr.bf16.mxu0 0
    %957 = vmatpush1.bf16.msra.mxu0 0
    %958 = vmatprep.subr.bf16.mxu0 0
    %959 = vmatpush1.bf16.msra.mxu0 0
    %960 = vmatprep.subr.bf16.mxu0 0
    %961 = vmatpush1.bf16.msra.mxu0 0
    %962 = vmatprep.subr.bf16.mxu0 0
    %963 = vmatpush1.bf16.msra.mxu0 0
    %964 = vmatprep.subr.bf16.mxu0 0
    %965 = vmatpush1.bf16.msra.mxu0 0
    %966 = vmatprep.subr.bf16.mxu0 0
    %967 = vmatpush1.bf16.msra.mxu0 0
    %968 = vmatprep.subr.bf16.mxu0 0
    %969 = vmatpush1.bf16.msra.mxu0 0
    %970 = vmatprep.mubr.bf16.mxu0 0
    %971 = vmatmul.mubr.bf16.gmra.mrb[0].mxu0 %v936
    %v972 = vpop.f32.mrb[0].mxu0
    %v973 = vadd.f32 %v922, %v972
    %v974 = vpop.f32.mrb[0].mxu0
    %v975 = vpop.f32.mrb[0].mxu0
    %v976 = vpop.f32.mrb[0].mxu0
    %977 = vdwg.mxu0
    %v978 = vadd.f32 %v845, %v973
    %v979 = vld [vmem:[%s11 + $0x1] sm:$0x1]
    %v980 = vld [vmem:[%s12 + $0x1] sm:$0x1]
    %v981 = vsel %vm147, %v978, 0.0
    %982 = vadd.xlane.f32.xlu0 %v981
    %v983 = vpop.xlane.xlu0 %982
    %v984 = vmul.f32 %v983, %v262
    %v985 = vsub.f32 %v978, %v984
    %v986 = vmul.f32 %v985, %v985
    %v987 = vsel %vm147, %v986, 0.0
    %988 = vadd.xlane.f32.xlu0 %v987
    %v989 = vpop.xlane.xlu0 %988
    %v990 = vmul.f32 %v989, %v262
    %v991 = vadd.f32 %v990, 1e-05
    %v992 = vrsqrt.pop %v991
    %v993 = vmul.f32 %v985, %v992
    %v994 = vlaneseq
    %v995 = vshrl.u32 %v994, 7
    %v996 = vsub.s32 0, %v995
    %v997 = vrot.slane %v979, %v996
    %v998 = vmul.f32 %v993, %v997
    %v999 = vlaneseq
    %v1000 = vshrl.u32 %v999, 7
    %v1001 = vsub.s32 0, %v1000
    %v1002 = vrot.slane %v980, %v1001
    %v1003 = vadd.f32 %v998, %v1002
    %v1004 = vpack.c.bf16 %v1003, %v1003
    %s1005 = scalar_lea.vmem %s7, 64
    %v1006 = vld [vmem:[%s1005] sm:$0xff]
    %v1007 = vld [vmem:[%s1005 + $0x8] sm:$0xff]
    %v1008 = vld [vmem:[%s1005 + $0x10] sm:$0xff]
    %v1009 = vld [vmem:[%s1005 + $0x18] sm:$0xff]
    %v1010 = vld [vmem:[%s1005 + $0x20] sm:$0xff]
    %v1011 = vld [vmem:[%s1005 + $0x28] sm:$0xff]
    %v1012 = vld [vmem:[%s1005 + $0x30] sm:$0xff]
    %v1013 = vld [vmem:[%s1005 + $0x38] sm:$0xff]
    %s1014 = scalar_lea.vmem %s8, 1
    %v1015 = vld [vmem:[%s1014] ss:$4 sm:$0xf]
    %v1017 = vlaneseq
    %v1018 = vshrl.u32 %v1017, 7
    %v1019 = vsub.s32 0, %v1018
    %v1020 = vrot.slane %v1015, %v1019
    %v1021 = vlaneseq
    %v1022 = vshrl.u32 %v1021, 7
    %v1023 = vsub.s32 1, %v1022
    %v1024 = vrot.slane %v1015, %v1023
    %v1025 = vlaneseq
    %v1026 = vshrl.u32 %v1025, 7
    %v1027 = vsub.s32 2, %v1026
    %v1028 = vrot.slane %v1015, %v1027
    %v1029 = vlaneseq
    %v1030 = vshrl.u32 %v1029, 7
    %v1031 = vsub.s32 3, %v1030
    %v1032 = vrot.slane %v1015, %v1031
    %v1045 = vunpack.c.l.b16 %v1006
    %v1046 = vunpack.c.h.b16 %v1006
    %v1047 = vunpack.c.l.b16 %v1007
    %v1048 = vunpack.c.h.b16 %v1007
    %v1049 = vunpack.c.l.b16 %v1008
    %v1050 = vunpack.c.h.b16 %v1008
    %v1051 = vunpack.c.l.b16 %v1009
    %v1052 = vunpack.c.h.b16 %v1009
    %v1053 = vunpack.c.l.b16 %v1010
    %v1054 = vunpack.c.h.b16 %v1010
    %v1055 = vunpack.c.l.b16 %v1011
    %v1056 = vunpack.c.h.b16 %v1011
    %v1057 = vunpack.c.l.b16 %v1012
    %v1058 = vunpack.c.h.b16 %v1012
    %v1059 = vunpack.c.l.b16 %v1013
    %v1060 = vunpack.c.h.b16 %v1013
    %v1061 = vpack.c.b16 %v1049, %v1045
    %v1062 = vpack.c.b16 %v1050, %v1046
    %v1063 = vpack.c.b16 %v1051, %v1047
    %v1064 = vpack.c.b16 %v1052, %v1048
    %v1065 = vpack.c.b16 %v1057, %v1053
    %v1066 = vpack.c.b16 %v1058, %v1054
    %v1067 = vpack.c.b16 %v1059, %v1055
    %v1068 = vpack.c.b16 %v1060, %v1056
    %v1078 = vsel %vm147, %v1004, 0
    %1080 = vmatprep.subr.bf16.mxu0 %v1062
    %1081 = vmatpush1.bf16.msra.mxu0 %v1061
    %1082 = vmatprep.subr.bf16.mxu0 %v1066
    %1083 = vmatpush1.bf16.msra.mxu0 %v1065
    %1084 = vmatprep.subr.bf16.mxu0 0
    %1085 = vmatpush1.bf16.msra.mxu0 0
    %1086 = vmatprep.subr.bf16.mxu0 0
    %1087 = vmatpush1.bf16.msra.mxu0 0
    %1088 = vmatprep.subr.bf16.mxu0 0
    %1089 = vmatpush1.bf16.msra.mxu0 0
    %1090 = vmatprep.subr.bf16.mxu0 0
    %1091 = vmatpush1.bf16.msra.mxu0 0
    %1092 = vmatprep.subr.bf16.mxu0 0
    %1093 = vmatpush1.bf16.msra.mxu0 0
    %1094 = vmatprep.subr.bf16.mxu0 0
    %1095 = vmatpush1.bf16.msra.mxu0 0
    %1096 = vmatprep.subr.bf16.mxu0 0
    %1097 = vmatpush1.bf16.msra.mxu0 0
    %1098 = vmatprep.subr.bf16.mxu0 0
    %1099 = vmatpush1.bf16.msra.mxu0 0
    %1100 = vmatprep.subr.bf16.mxu0 0
    %1101 = vmatpush1.bf16.msra.mxu0 0
    %1102 = vmatprep.subr.bf16.mxu0 0
    %1103 = vmatpush1.bf16.msra.mxu0 0
    %1104 = vmatprep.subr.bf16.mxu0 0
    %1105 = vmatpush1.bf16.msra.mxu0 0
    %1106 = vmatprep.subr.bf16.mxu0 0
    %1107 = vmatpush1.bf16.msra.mxu0 0
    %1108 = vmatprep.subr.bf16.mxu0 0
    %1109 = vmatpush1.bf16.msra.mxu0 0
    %1110 = vmatprep.subr.bf16.mxu0 0
    %1111 = vmatpush1.bf16.msra.mxu0 0
    %1112 = vmatprep.mubr.bf16.mxu0 0
    %1113 = vmatmul.mubr.bf16.gmra.mrb[0].mxu0 %v1078
    %v1114 = vpop.f32.mrb[0].mxu0
    %v1115 = vadd.f32 %v1020, %v1114
    %v1116 = vpop.f32.mrb[0].mxu0
    %v1117 = vadd.f32 %v1024, %v1116
    %v1118 = vpop.f32.mrb[0].mxu0
    %v1119 = vpop.f32.mrb[0].mxu0
    %1120 = vdwg.mxu0
    %1121 = vmatprep.subr.bf16.mxu0 %v1064
    %1122 = vmatpush1.bf16.msra.mxu0 %v1063
    %1123 = vmatprep.subr.bf16.mxu0 %v1068
    %1124 = vmatpush1.bf16.msra.mxu0 %v1067
    %1125 = vmatprep.subr.bf16.mxu0 0
    %1126 = vmatpush1.bf16.msra.mxu0 0
    %1127 = vmatprep.subr.bf16.mxu0 0
    %1128 = vmatpush1.bf16.msra.mxu0 0
    %1129 = vmatprep.subr.bf16.mxu0 0
    %1130 = vmatpush1.bf16.msra.mxu0 0
    %1131 = vmatprep.subr.bf16.mxu0 0
    %1132 = vmatpush1.bf16.msra.mxu0 0
    %1133 = vmatprep.subr.bf16.mxu0 0
    %1134 = vmatpush1.bf16.msra.mxu0 0
    %1135 = vmatprep.subr.bf16.mxu0 0
    %1136 = vmatpush1.bf16.msra.mxu0 0
    %1137 = vmatprep.subr.bf16.mxu0 0
    %1138 = vmatpush1.bf16.msra.mxu0 0
    %1139 = vmatprep.subr.bf16.mxu0 0
    %1140 = vmatpush1.bf16.msra.mxu0 0
    %1141 = vmatprep.subr.bf16.mxu0 0
    %1142 = vmatpush1.bf16.msra.mxu0 0
    %1143 = vmatprep.subr.bf16.mxu0 0
    %1144 = vmatpush1.bf16.msra.mxu0 0
    %1145 = vmatprep.subr.bf16.mxu0 0
    %1146 = vmatpush1.bf16.msra.mxu0 0
    %1147 = vmatprep.subr.bf16.mxu0 0
    %1148 = vmatpush1.bf16.msra.mxu0 0
    %1149 = vmatprep.subr.bf16.mxu0 0
    %1150 = vmatpush1.bf16.msra.mxu0 0
    %1151 = vmatprep.subr.bf16.mxu0 0
    %1152 = vmatpush1.bf16.msra.mxu0 0
    %1153 = vmatprep.mubr.bf16.mxu0 0
    %1154 = vmatmul.mubr.bf16.gmra.mrb[0].mxu0 %v1078
    %v1155 = vpop.f32.mrb[0].mxu0
    %v1156 = vadd.f32 %v1028, %v1155
    %v1157 = vpop.f32.mrb[0].mxu0
    %v1158 = vadd.f32 %v1032, %v1157
    %v1159 = vpop.f32.mrb[0].mxu0
    %v1160 = vpop.f32.mrb[0].mxu0
    %1161 = vdwg.mxu0
    %v1162 = vmul.f32 %v1115, 0.5
    %v1163 = vmul.f32 %v1117, 0.5
    %v1164 = vmul.f32 %v1156, 0.5
    %v1165 = vmul.f32 %v1158, 0.5
    %v1166 = vmul.f32 %v1115, 0.044715
    %v1167 = vmul.f32 %v1117, 0.044715
    %v1168 = vmul.f32 %v1156, 0.044715
    %v1169 = vmul.f32 %v1158, 0.044715
    %v1170 = vmul.f32 %v1166, %v1115
    %v1171 = vmul.f32 %v1167, %v1117
    %v1172 = vmul.f32 %v1168, %v1156
    %v1173 = vmul.f32 %v1169, %v1158
    %v1174 = vmul.f32 %v1170, %v1115
    %v1175 = vmul.f32 %v1171, %v1117
    %v1176 = vmul.f32 %v1172, %v1156
    %v1177 = vmul.f32 %v1173, %v1158
    %v1178 = vadd.f32 %v1115, %v1174
    %v1179 = vadd.f32 %v1117, %v1175
    %v1180 = vadd.f32 %v1156, %v1176
    %v1181 = vadd.f32 %v1158, %v1177
    %v1182 = vmul.f32 %v1178, 0.7978846
    %v1183 = vmul.f32 %v1179, 0.7978846
    %v1184 = vmul.f32 %v1180, 0.7978846
    %v1185 = vmul.f32 %v1181, 0.7978846
    %v1186 = vtanh.pop %v1182
    %v1187 = vtanh.pop %v1183
    %v1188 = vtanh.pop %v1184
    %v1189 = vtanh.pop %v1185
    %v1190 = vadd.f32 %v1186, 1.0
    %v1191 = vadd.f32 %v1187, 1.0
    %v1192 = vadd.f32 %v1188, 1.0
    %v1193 = vadd.f32 %v1189, 1.0
    %v1194 = vmul.f32 %v1162, %v1190
    %v1195 = vmul.f32 %v1163, %v1191
    %v1196 = vmul.f32 %v1164, %v1192
    %v1197 = vmul.f32 %v1165, %v1193
    %v1198 = vpack.c.bf16 %v1194, %v1194
    %v1199 = vpack.c.bf16 %v1195, %v1195
    %v1200 = vpack.c.bf16 %v1196, %v1196
    %v1201 = vpack.c.bf16 %v1197, %v1197
    %s1202 = scalar_lea.vmem %s9, 256
    %v1203 = vld [vmem:[%s1202] sm:$0xf]
    %v1204 = vld [vmem:[%s1202 + $0x4] sm:$0xf]
    %v1205 = vld [vmem:[%s1202 + $0x8] sm:$0xf]
    %v1206 = vld [vmem:[%s1202 + $0xc] sm:$0xf]
    %v1207 = vld [vmem:[%s1202 + $0x10] sm:$0xf]
    %v1208 = vld [vmem:[%s1202 + $0x14] sm:$0xf]
    %v1209 = vld [vmem:[%s1202 + $0x18] sm:$0xf]
    %v1210 = vld [vmem:[%s1202 + $0x1c] sm:$0xf]
    %v1211 = vld [vmem:[%s1202 + $0x20] sm:$0xf]
    %v1212 = vld [vmem:[%s1202 + $0x24] sm:$0xf]
    %v1213 = vld [vmem:[%s1202 + $0x28] sm:$0xf]
    %v1214 = vld [vmem:[%s1202 + $0x2c] sm:$0xf]
    %v1215 = vld [vmem:[%s1202 + $0x30] sm:$0xf]
    %v1216 = vld [vmem:[%s1202 + $0x34] sm:$0xf]
    %v1217 = vld [vmem:[%s1202 + $0x38] sm:$0xf]
    %v1218 = vld [vmem:[%s1202 + $0x3c] sm:$0xf]
    %v1219 = vld [vmem:[%s1202 + $0x40] sm:$0xf]
    %v1220 = vld [vmem:[%s1202 + $0x44] sm:$0xf]
    %v1221 = vld [vmem:[%s1202 + $0x48] sm:$0xf]
    %v1222 = vld [vmem:[%s1202 + $0x4c] sm:$0xf]
    %v1223 = vld [vmem:[%s1202 + $0x50] sm:$0xf]
    %v1224 = vld [vmem:[%s1202 + $0x54] sm:$0xf]
    %v1225 = vld [vmem:[%s1202 + $0x58] sm:$0xf]
    %v1226 = vld [vmem:[%s1202 + $0x5c] sm:$0xf]
    %v1227 = vld [vmem:[%s1202 + $0x60] sm:$0xf]
    %v1228 = vld [vmem:[%s1202 + $0x64] sm:$0xf]
    %v1229 = vld [vmem:[%s1202 + $0x68] sm:$0xf]
    %v1230 = vld [vmem:[%s1202 + $0x6c] sm:$0xf]
    %v1231 = vld [vmem:[%s1202 + $0x70] sm:$0xf]
    %v1232 = vld [vmem:[%s1202 + $0x74] sm:$0xf]
    %v1233 = vld [vmem:[%s1202 + $0x78] sm:$0xf]
    %v1234 = vld [vmem:[%s1202 + $0x7c] sm:$0xf]
    %v1235 = vld [vmem:[%s1202 + $0x80] sm:$0xf]
    %v1236 = vld [vmem:[%s1202 + $0x84] sm:$0xf]
    %v1237 = vld [vmem:[%s1202 + $0x88] sm:$0xf]
    %v1238 = vld [vmem:[%s1202 + $0x8c] sm:$0xf]
    %v1239 = vld [vmem:[%s1202 + $0x90] sm:$0xf]
    %v1240 = vld [vmem:[%s1202 + $0x94] sm:$0xf]
    %v1241 = vld [vmem:[%s1202 + $0x98] sm:$0xf]
    %v1242 = vld [vmem:[%s1202 + $0x9c] sm:$0xf]
    %v1243 = vld [vmem:[%s1202 + $0xa0] sm:$0xf]
    %v1244 = vld [vmem:[%s1202 + $0xa4] sm:$0xf]
    %v1245 = vld [vmem:[%s1202 + $0xa8] sm:$0xf]
    %v1246 = vld [vmem:[%s1202 + $0xac] sm:$0xf]
    %v1247 = vld [vmem:[%s1202 + $0xb0] sm:$0xf]
    %v1248 = vld [vmem:[%s1202 + $0xb4] sm:$0xf]
    %v1249 = vld [vmem:[%s1202 + $0xb8] sm:$0xf]
    %v1250 = vld [vmem:[%s1202 + $0xbc] sm:$0xf]
    %v1251 = vld [vmem:[%s1202 + $0xc0] sm:$0xf]
    %v1252 = vld [vmem:[%s1202 + $0xc4] sm:$0xf]
    %v1253 = vld [vmem:[%s1202 + $0xc8] sm:$0xf]
    %v1254 = vld [vmem:[%s1202 + $0xcc] sm:$0xf]
    %v1255 = vld [vmem:[%s1202 + $0xd0] sm:$0xf]
    %v1256 = vld [vmem:[%s1202 + $0xd4] sm:$0xf]
    %v1257 = vld [vmem:[%s1202 + $0xd8] sm:$0xf]
    %v1258 = vld [vmem:[%s1202 + $0xdc] sm:$0xf]
    %v1259 = vld [vmem:[%s1202 + $0xe0] sm:$0xf]
    %v1260 = vld [vmem:[%s1202 + $0xe4] sm:$0xf]
    %v1261 = vld [vmem:[%s1202 + $0xe8] sm:$0xf]
    %v1262 = vld [vmem:[%s1202 + $0xec] sm:$0xf]
    %v1263 = vld [vmem:[%s1202 + $0xf0] sm:$0xf]
    %v1264 = vld [vmem:[%s1202 + $0xf4] sm:$0xf]
    %v1265 = vld [vmem:[%s1202 + $0xf8] sm:$0xf]
    %v1266 = vld [vmem:[%s1202 + $0xfc] sm:$0xf]
    %v1267 = vld [vmem:[%s10 + $0x1] sm:$0x1]
    %v1268 = vlaneseq
    %v1269 = vshrl.u32 %v1268, 7
    %v1270 = vsub.s32 0, %v1269
    %v1271 = vrot.slane %v1267, %v1270
    %v1336 = vunpack.c.l.b16 %v1203
    %v1337 = vunpack.c.l.b16 %v1204
    %v1338 = vunpack.c.l.b16 %v1205
    %v1339 = vunpack.c.l.b16 %v1206
    %v1340 = vunpack.c.l.b16 %v1207
    %v1341 = vunpack.c.l.b16 %v1208
    %v1342 = vunpack.c.l.b16 %v1209
    %v1343 = vunpack.c.l.b16 %v1210
    %v1344 = vunpack.c.l.b16 %v1211
    %v1345 = vunpack.c.l.b16 %v1212
    %v1346 = vunpack.c.l.b16 %v1213
    %v1347 = vunpack.c.l.b16 %v1214
    %v1348 = vunpack.c.l.b16 %v1215
    %v1349 = vunpack.c.l.b16 %v1216
    %v1350 = vunpack.c.l.b16 %v1217
    %v1351 = vunpack.c.l.b16 %v1218
    %v1352 = vunpack.c.l.b16 %v1219
    %v1353 = vunpack.c.l.b16 %v1220
    %v1354 = vunpack.c.l.b16 %v1221
    %v1355 = vunpack.c.l.b16 %v1222
    %v1356 = vunpack.c.l.b16 %v1223
    %v1357 = vunpack.c.l.b16 %v1224
    %v1358 = vunpack.c.l.b16 %v1225
    %v1359 = vunpack.c.l.b16 %v1226
    %v1360 = vunpack.c.l.b16 %v1227
    %v1361 = vunpack.c.l.b16 %v1228
    %v1362 = vunpack.c.l.b16 %v1229
    %v1363 = vunpack.c.l.b16 %v1230
    %v1364 = vunpack.c.l.b16 %v1231
    %v1365 = vunpack.c.l.b16 %v1232
    %v1366 = vunpack.c.l.b16 %v1233
    %v1367 = vunpack.c.l.b16 %v1234
    %v1368 = vunpack.c.l.b16 %v1235
    %v1369 = vunpack.c.l.b16 %v1236
    %v1370 = vunpack.c.l.b16 %v1237
    %v1371 = vunpack.c.l.b16 %v1238
    %v1372 = vunpack.c.l.b16 %v1239
    %v1373 = vunpack.c.l.b16 %v1240
    %v1374 = vunpack.c.l.b16 %v1241
    %v1375 = vunpack.c.l.b16 %v1242
    %v1376 = vunpack.c.l.b16 %v1243
    %v1377 = vunpack.c.l.b16 %v1244
    %v1378 = vunpack.c.l.b16 %v1245
    %v1379 = vunpack.c.l.b16 %v1246
    %v1380 = vunpack.c.l.b16 %v1247
    %v1381 = vunpack.c.l.b16 %v1248
    %v1382 = vunpack.c.l.b16 %v1249
    %v1383 = vunpack.c.l.b16 %v1250
    %v1384 = vunpack.c.l.b16 %v1251
    %v1385 = vunpack.c.l.b16 %v1252
    %v1386 = vunpack.c.l.b16 %v1253
    %v1387 = vunpack.c.l.b16 %v1254
    %v1388 = vunpack.c.l.b16 %v1255
    %v1389 = vunpack.c.l.b16 %v1256
    %v1390 = vunpack.c.l.b16 %v1257
    %v1391 = vunpack.c.l.b16 %v1258
    %v1392 = vunpack.c.l.b16 %v1259
    %v1393 = vunpack.c.l.b16 %v1260
    %v1394 = vunpack.c.l.b16 %v1261
    %v1395 = vunpack.c.l.b16 %v1262
    %v1396 = vunpack.c.l.b16 %v1263
    %v1397 = vunpack.c.l.b16 %v1264
    %v1398 = vunpack.c.l.b16 %v1265
    %v1399 = vunpack.c.l.b16 %v1266
    %v1400 = vpack.c.b16 %v1337, %v1336
    %v1401 = vpack.c.b16 %v1339, %v1338
    %v1402 = vpack.c.b16 %v1341, %v1340
    %v1403 = vpack.c.b16 %v1343, %v1342
    %v1404 = vpack.c.b16 %v1345, %v1344
    %v1405 = vpack.c.b16 %v1347, %v1346
    %v1406 = vpack.c.b16 %v1349, %v1348
    %v1407 = vpack.c.b16 %v1351, %v1350
    %v1408 = vpack.c.b16 %v1353, %v1352
    %v1409 = vpack.c.b16 %v1355, %v1354
    %v1410 = vpack.c.b16 %v1357, %v1356
    %v1411 = vpack.c.b16 %v1359, %v1358
    %v1412 = vpack.c.b16 %v1361, %v1360
    %v1413 = vpack.c.b16 %v1363, %v1362
    %v1414 = vpack.c.b16 %v1365, %v1364
    %v1415 = vpack.c.b16 %v1367, %v1366
    %v1416 = vpack.c.b16 %v1369, %v1368
    %v1417 = vpack.c.b16 %v1371, %v1370
    %v1418 = vpack.c.b16 %v1373, %v1372
    %v1419 = vpack.c.b16 %v1375, %v1374
    %v1420 = vpack.c.b16 %v1377, %v1376
    %v1421 = vpack.c.b16 %v1379, %v1378
    %v1422 = vpack.c.b16 %v1381, %v1380
    %v1423 = vpack.c.b16 %v1383, %v1382
    %v1424 = vpack.c.b16 %v1385, %v1384
    %v1425 = vpack.c.b16 %v1387, %v1386
    %v1426 = vpack.c.b16 %v1389, %v1388
    %v1427 = vpack.c.b16 %v1391, %v1390
    %v1428 = vpack.c.b16 %v1393, %v1392
    %v1429 = vpack.c.b16 %v1395, %v1394
    %v1430 = vpack.c.b16 %v1397, %v1396
    %v1431 = vpack.c.b16 %v1399, %v1398
    %1464 = vmatprep.subr.bf16.mxu0 0
    %1465 = vmatpush1.bf16.msra.mxu0 %v1400
    %1466 = vmatprep.subr.bf16.mxu0 0
    %1467 = vmatpush1.bf16.msra.mxu0 %v1401
    %1468 = vmatprep.subr.bf16.mxu0 0
    %1469 = vmatpush1.bf16.msra.mxu0 %v1402
    %1470 = vmatprep.subr.bf16.mxu0 0
    %1471 = vmatpush1.bf16.msra.mxu0 %v1403
    %1472 = vmatprep.subr.bf16.mxu0 0
    %1473 = vmatpush1.bf16.msra.mxu0 %v1404
    %1474 = vmatprep.subr.bf16.mxu0 0
    %1475 = vmatpush1.bf16.msra.mxu0 %v1405
    %1476 = vmatprep.subr.bf16.mxu0 0
    %1477 = vmatpush1.bf16.msra.mxu0 %v1406
    %1478 = vmatprep.subr.bf16.mxu0 0
    %1479 = vmatpush1.bf16.msra.mxu0 %v1407
    %1480 = vmatprep.subr.bf16.mxu0 0
    %1481 = vmatpush1.bf16.msra.mxu0 %v1408
    %1482 = vmatprep.subr.bf16.mxu0 0
    %1483 = vmatpush1.bf16.msra.mxu0 %v1409
    %1484 = vmatprep.subr.bf16.mxu0 0
    %1485 = vmatpush1.bf16.msra.mxu0 %v1410
    %1486 = vmatprep.subr.bf16.mxu0 0
    %1487 = vmatpush1.bf16.msra.mxu0 %v1411
    %1488 = vmatprep.subr.bf16.mxu0 0
    %1489 = vmatpush1.bf16.msra.mxu0 %v1412
    %1490 = vmatprep.subr.bf16.mxu0 0
    %1491 = vmatpush1.bf16.msra.mxu0 %v1413
    %1492 = vmatprep.subr.bf16.mxu0 0
    %1493 = vmatpush1.bf16.msra.mxu0 %v1414
    %1494 = vmatprep.subr.bf16.mxu0 0
    %1495 = vmatpush1.bf16.msra.mxu0 %v1415
    %1496 = vmatprep.mubr.bf16.mxu0 %v1199
    %1497 = vmatmul.mubr.bf16.gmra.mrb[0].mxu0 %v1198
    %v1498 = vpop.f32.mrb[0].mxu0
    %v1499 = vadd.f32 %v1271, %v1498
    %v1500 = vpop.f32.mrb[0].mxu0
    %v1501 = vpop.f32.mrb[0].mxu0
    %v1502 = vpop.f32.mrb[0].mxu0
    %1503 = vdwg.mxu0
    %1504 = vmatprep.subr.bf16.mxu0 0
    %1505 = vmatpush1.bf16.msra.mxu0 %v1416
    %1506 = vmatprep.subr.bf16.mxu0 0
    %1507 = vmatpush1.bf16.msra.mxu0 %v1417
    %1508 = vmatprep.subr.bf16.mxu0 0
    %1509 = vmatpush1.bf16.msra.mxu0 %v1418
    %1510 = vmatprep.subr.bf16.mxu0 0
    %1511 = vmatpush1.bf16.msra.mxu0 %v1419
    %1512 = vmatprep.subr.bf16.mxu0 0
    %1513 = vmatpush1.bf16.msra.mxu0 %v1420
    %1514 = vmatprep.subr.bf16.mxu0 0
    %1515 = vmatpush1.bf16.msra.mxu0 %v1421
    %1516 = vmatprep.subr.bf16.mxu0 0
    %1517 = vmatpush1.bf16.msra.mxu0 %v1422
    %1518 = vmatprep.subr.bf16.mxu0 0
    %1519 = vmatpush1.bf16.msra.mxu0 %v1423
    %1520 = vmatprep.subr.bf16.mxu0 0
    %1521 = vmatpush1.bf16.msra.mxu0 %v1424
    %1522 = vmatprep.subr.bf16.mxu0 0
    %1523 = vmatpush1.bf16.msra.mxu0 %v1425
    %1524 = vmatprep.subr.bf16.mxu0 0
    %1525 = vmatpush1.bf16.msra.mxu0 %v1426
    %1526 = vmatprep.subr.bf16.mxu0 0
    %1527 = vmatpush1.bf16.msra.mxu0 %v1427
    %1528 = vmatprep.subr.bf16.mxu0 0
    %1529 = vmatpush1.bf16.msra.mxu0 %v1428
    %1530 = vmatprep.subr.bf16.mxu0 0
    %1531 = vmatpush1.bf16.msra.mxu0 %v1429
    %1532 = vmatprep.subr.bf16.mxu0 0
    %1533 = vmatpush1.bf16.msra.mxu0 %v1430
    %1534 = vmatprep.subr.bf16.mxu0 0
    %1535 = vmatpush1.bf16.msra.mxu0 %v1431
    %1536 = vmatprep.mubr.bf16.mxu0 %v1201
    %1537 = vmatmul.mubr.bf16.gmra.mrb[0].mxu0 %v1200
    %v1538 = vpop.f32.mrb[0].mxu0
    %v1539 = vadd.f32 %v1499, %v1538
    %v1540 = vpop.f32.mrb[0].mxu0
    %v1541 = vpop.f32.mrb[0].mxu0
    %v1542 = vpop.f32.mrb[0].mxu0
    %1543 = vdwg.mxu0
    %v1544 = vadd.f32 %v1003, %v1539
    %v1545 = vld [vmem:[%s13 + $0x1] sm:$0x1]
    %v1546 = vld [vmem:[%s14 + $0x1] sm:$0x1]
    %v1547 = vsel %vm147, %v1544, 0.0
    %1548 = vadd.xlane.f32.xlu0 %v1547
    %v1549 = vpop.xlane.xlu0 %1548
    %v1550 = vmul.f32 %v1549, %v262
    %v1551 = vsub.f32 %v1544, %v1550
    %v1552 = vmul.f32 %v1551, %v1551
    %v1553 = vsel %vm147, %v1552, 0.0
    %1554 = vadd.xlane.f32.xlu0 %v1553
    %v1555 = vpop.xlane.xlu0 %1554
    %v1556 = vmul.f32 %v1555, %v262
    %v1557 = vadd.f32 %v1556, 1e-05
    %v1558 = vrsqrt.pop %v1557
    %v1559 = vmul.f32 %v1551, %v1558
    %v1560 = vlaneseq
    %v1561 = vshrl.u32 %v1560, 7
    %v1562 = vsub.s32 0, %v1561
    %v1563 = vrot.slane %v1545, %v1562
    %v1564 = vmul.f32 %v1559, %v1563
    %v1565 = vlaneseq
    %v1566 = vshrl.u32 %v1565, 7
    %v1567 = vsub.s32 0, %v1566
    %v1568 = vrot.slane %v1546, %v1567
    %v1569 = vadd.f32 %v1564, %v1568
    %v1570 = vpack.c.bf16 %v1569, %v1569
    %s1571 = scalar_lea.vmem %s3, 32
    %v1572 = vld [vmem:[%s1571] sm:$0xf]
    %v1573 = vld [vmem:[%s1571 + $0x4] sm:$0xf]
    %v1574 = vld [vmem:[%s1571 + $0x8] sm:$0xf]
    %v1575 = vld [vmem:[%s1571 + $0xc] sm:$0xf]
    %v1576 = vld [vmem:[%s5 + $0x2] sm:$0x1]
    %v1577 = vlaneseq
    %v1578 = vshrl.u32 %v1577, 7
    %v1579 = vsub.s32 0, %v1578
    %v1580 = vrot.slane %v1576, %v1579
    %v1585 = vunpack.c.l.b16 %v1572
    %v1586 = vunpack.c.l.b16 %v1573
    %v1587 = vunpack.c.l.b16 %v1574
    %v1588 = vunpack.c.l.b16 %v1575
    %v1589 = vpack.c.b16 %v1586, %v1585
    %v1590 = vpack.c.b16 %v1588, %v1587
    %v1594 = vsel %vm147, %v1570, 0
    %1596 = vmatprep.subr.bf16.mxu0 0
    %1597 = vmatpush1.bf16.msra.mxu0 %v1589
    %1598 = vmatprep.subr.bf16.mxu0 0
    %1599 = vmatpush1.bf16.msra.mxu0 %v1590
    %1600 = vmatprep.subr.bf16.mxu0 0
    %1601 = vmatpush1.bf16.msra.mxu0 0
    %1602 = vmatprep.subr.bf16.mxu0 0
    %1603 = vmatpush1.bf16.msra.mxu0 0
    %1604 = vmatprep.subr.bf16.mxu0 0
    %1605 = vmatpush1.bf16.msra.mxu0 0
    %1606 = vmatprep.subr.bf16.mxu0 0
    %1607 = vmatpush1.bf16.msra.mxu0 0
    %1608 = vmatprep.subr.bf16.mxu0 0
    %1609 = vmatpush1.bf16.msra.mxu0 0
    %1610 = vmatprep.subr.bf16.mxu0 0
    %1611 = vmatpush1.bf16.msra.mxu0 0
    %1612 = vmatprep.subr.bf16.mxu0 0
    %1613 = vmatpush1.bf16.msra.mxu0 0
    %1614 = vmatprep.subr.bf16.mxu0 0
    %1615 = vmatpush1.bf16.msra.mxu0 0
    %1616 = vmatprep.subr.bf16.mxu0 0
    %1617 = vmatpush1.bf16.msra.mxu0 0
    %1618 = vmatprep.subr.bf16.mxu0 0
    %1619 = vmatpush1.bf16.msra.mxu0 0
    %1620 = vmatprep.subr.bf16.mxu0 0
    %1621 = vmatpush1.bf16.msra.mxu0 0
    %1622 = vmatprep.subr.bf16.mxu0 0
    %1623 = vmatpush1.bf16.msra.mxu0 0
    %1624 = vmatprep.subr.bf16.mxu0 0
    %1625 = vmatpush1.bf16.msra.mxu0 0
    %1626 = vmatprep.subr.bf16.mxu0 0
    %1627 = vmatpush1.bf16.msra.mxu0 0
    %1628 = vmatprep.mubr.bf16.mxu0 0
    %1629 = vmatmul.mubr.bf16.gmra.mrb[0].mxu0 %v1594
    %v1630 = vpop.f32.mrb[0].mxu0
    %v1631 = vadd.f32 %v1580, %v1630
    %v1632 = vpop.f32.mrb[0].mxu0
    %v1633 = vpop.f32.mrb[0].mxu0
    %v1634 = vpop.f32.mrb[0].mxu0
    %1635 = vdwg.mxu0
    %v1636 = vpack.c.bf16 %v1631, %v1631
    %s1637 = scalar_lea.vmem %s4, 32
    %v1638 = vld [vmem:[%s1637] sm:$0xf]
    %v1639 = vld [vmem:[%s1637 + $0x4] sm:$0xf]
    %v1640 = vld [vmem:[%s1637 + $0x8] sm:$0xf]
    %v1641 = vld [vmem:[%s1637 + $0xc] sm:$0xf]
    %v1642 = vld [vmem:[%s6 + $0x2] sm:$0x1]
    %v1643 = vlaneseq
    %v1644 = vshrl.u32 %v1643, 7
    %v1645 = vsub.s32 0, %v1644
    %v1646 = vrot.slane %v1642, %v1645
    %v1651 = vunpack.c.l.b16 %v1638
    %v1652 = vunpack.c.l.b16 %v1639
    %v1653 = vunpack.c.l.b16 %v1640
    %v1654 = vunpack.c.l.b16 %v1641
    %v1655 = vpack.c.b16 %v1652, %v1651
    %v1656 = vpack.c.b16 %v1654, %v1653
    %v1660 = vsel %vm147, %v1636, 0
    %1662 = vmatprep.subr.bf16.mxu0 0
    %1663 = vmatpush1.bf16.msra.mxu0 %v1655
    %1664 = vmatprep.subr.bf16.mxu0 0
    %1665 = vmatpush1.bf16.msra.mxu0 %v1656
    %1666 = vmatprep.subr.bf16.mxu0 0
    %1667 = vmatpush1.bf16.msra.mxu0 0
    %1668 = vmatprep.subr.bf16.mxu0 0
    %1669 = vmatpush1.bf16.msra.mxu0 0
    %1670 = vmatprep.subr.bf16.mxu0 0
    %1671 = vmatpush1.bf16.msra.mxu0 0
    %1672 = vmatprep.subr.bf16.mxu0 0
    %1673 = vmatpush1.bf16.msra.mxu0 0
    %1674 = vmatprep.subr.bf16.mxu0 0
    %1675 = vmatpush1.bf16.msra.mxu0 0
    %1676 = vmatprep.subr.bf16.mxu0 0
    %1677 = vmatpush1.bf16.msra.mxu0 0
    %1678 = vmatprep.subr.bf16.mxu0 0
    %1679 = vmatpush1.bf16.msra.mxu0 0
    %1680 = vmatprep.subr.bf16.mxu0 0
    %1681 = vmatpush1.bf16.msra.mxu0 0
    %1682 = vmatprep.subr.bf16.mxu0 0
    %1683 = vmatpush1.bf16.msra.mxu0 0
    %1684 = vmatprep.subr.bf16.mxu0 0
    %1685 = vmatpush1.bf16.msra.mxu0 0
    %1686 = vmatprep.subr.bf16.mxu0 0
    %1687 = vmatpush1.bf16.msra.mxu0 0
    %1688 = vmatprep.subr.bf16.mxu0 0
    %1689 = vmatpush1.bf16.msra.mxu0 0
    %1690 = vmatprep.subr.bf16.mxu0 0
    %1691 = vmatpush1.bf16.msra.mxu0 0
    %1692 = vmatprep.subr.bf16.mxu0 0
    %1693 = vmatpush1.bf16.msra.mxu0 0
    %1694 = vmatprep.mubr.bf16.mxu0 0
    %1695 = vmatmul.mubr.bf16.gmra.mrb[0].mxu0 %v1660
    %v1696 = vpop.f32.mrb[0].mxu0
    %v1697 = vadd.f32 %v1646, %v1696
    %v1698 = vpop.f32.mrb[0].mxu0
    %v1699 = vpop.f32.mrb[0].mxu0
    %v1700 = vpop.f32.mrb[0].mxu0
    %1701 = vdwg.mxu0
    %v1702 = vadd.f32 %v1569, %v1697
    %v1703 = vld [vmem:[%s11 + $0x2] sm:$0x1]
    %v1704 = vld [vmem:[%s12 + $0x2] sm:$0x1]
    %v1705 = vsel %vm147, %v1702, 0.0
    %1706 = vadd.xlane.f32.xlu0 %v1705
    %v1707 = vpop.xlane.xlu0 %1706
    %v1708 = vmul.f32 %v1707, %v262
    %v1709 = vsub.f32 %v1702, %v1708
    %v1710 = vmul.f32 %v1709, %v1709
    %v1711 = vsel %vm147, %v1710, 0.0
    %1712 = vadd.xlane.f32.xlu0 %v1711
    %v1713 = vpop.xlane.xlu0 %1712
    %v1714 = vmul.f32 %v1713, %v262
    %v1715 = vadd.f32 %v1714, 1e-05
    %v1716 = vrsqrt.pop %v1715
    %v1717 = vmul.f32 %v1709, %v1716
    %v1718 = vlaneseq
    %v1719 = vshrl.u32 %v1718, 7
    %v1720 = vsub.s32 0, %v1719
    %v1721 = vrot.slane %v1703, %v1720
    %v1722 = vmul.f32 %v1717, %v1721
    %v1723 = vlaneseq
    %v1724 = vshrl.u32 %v1723, 7
    %v1725 = vsub.s32 0, %v1724
    %v1726 = vrot.slane %v1704, %v1725
    %v1727 = vadd.f32 %v1722, %v1726
    %v1728 = vpack.c.bf16 %v1727, %v1727
    %s1729 = scalar_lea.vmem %s7, 128
    %v1730 = vld [vmem:[%s1729] sm:$0xff]
    %v1731 = vld [vmem:[%s1729 + $0x8] sm:$0xff]
    %v1732 = vld [vmem:[%s1729 + $0x10] sm:$0xff]
    %v1733 = vld [vmem:[%s1729 + $0x18] sm:$0xff]
    %v1734 = vld [vmem:[%s1729 + $0x20] sm:$0xff]
    %v1735 = vld [vmem:[%s1729 + $0x28] sm:$0xff]
    %v1736 = vld [vmem:[%s1729 + $0x30] sm:$0xff]
    %v1737 = vld [vmem:[%s1729 + $0x38] sm:$0xff]
    %s1738 = scalar_lea.vmem %s8, 2
    %v1739 = vld [vmem:[%s1738] ss:$4 sm:$0xf]
    %v1741 = vlaneseq
    %v1742 = vshrl.u32 %v1741, 7
    %v1743 = vsub.s32 0, %v1742
    %v1744 = vrot.slane %v1739, %v1743
    %v1745 = vlaneseq
    %v1746 = vshrl.u32 %v1745, 7
    %v1747 = vsub.s32 1, %v1746
    %v1748 = vrot.slane %v1739, %v1747
    %v1749 = vlaneseq
    %v1750 = vshrl.u32 %v1749, 7
    %v1751 = vsub.s32 2, %v1750
    %v1752 = vrot.slane %v1739, %v1751
    %v1753 = vlaneseq
    %v1754 = vshrl.u32 %v1753, 7
    %v1755 = vsub.s32 3, %v1754
    %v1756 = vrot.slane %v1739, %v1755
    %v1769 = vunpack.c.l.b16 %v1730
    %v1770 = vunpack.c.h.b16 %v1730
    %v1771 = vunpack.c.l.b16 %v1731
    %v1772 = vunpack.c.h.b16 %v1731
    %v1773 = vunpack.c.l.b16 %v1732
    %v1774 = vunpack.c.h.b16 %v1732
    %v1775 = vunpack.c.l.b16 %v1733
    %v1776 = vunpack.c.h.b16 %v1733
    %v1777 = vunpack.c.l.b16 %v1734
    %v1778 = vunpack.c.h.b16 %v1734
    %v1779 = vunpack.c.l.b16 %v1735
    %v1780 = vunpack.c.h.b16 %v1735
    %v1781 = vunpack.c.l.b16 %v1736
    %v1782 = vunpack.c.h.b16 %v1736
    %v1783 = vunpack.c.l.b16 %v1737
    %v1784 = vunpack.c.h.b16 %v1737
    %v1785 = vpack.c.b16 %v1773, %v1769
    %v1786 = vpack.c.b16 %v1774, %v1770
    %v1787 = vpack.c.b16 %v1775, %v1771
    %v1788 = vpack.c.b16 %v1776, %v1772
    %v1789 = vpack.c.b16 %v1781, %v1777
    %v1790 = vpack.c.b16 %v1782, %v1778
    %v1791 = vpack.c.b16 %v1783, %v1779
    %v1792 = vpack.c.b16 %v1784, %v1780
    %v1802 = vsel %vm147, %v1728, 0
    %1804 = vmatprep.subr.bf16.mxu0 %v1786
    %1805 = vmatpush1.bf16.msra.mxu0 %v1785
    %1806 = vmatprep.subr.bf16.mxu0 %v1790
    %1807 = vmatpush1.bf16.msra.mxu0 %v1789
    %1808 = vmatprep.subr.bf16.mxu0 0
    %1809 = vmatpush1.bf16.msra.mxu0 0
    %1810 = vmatprep.subr.bf16.mxu0 0
    %1811 = vmatpush1.bf16.msra.mxu0 0
    %1812 = vmatprep.subr.bf16.mxu0 0
    %1813 = vmatpush1.bf16.msra.mxu0 0
    %1814 = vmatprep.subr.bf16.mxu0 0
    %1815 = vmatpush1.bf16.msra.mxu0 0
    %1816 = vmatprep.subr.bf16.mxu0 0
    %1817 = vmatpush1.bf16.msra.mxu0 0
    %1818 = vmatprep.subr.bf16.mxu0 0
    %1819 = vmatpush1.bf16.msra.mxu0 0
    %1820 = vmatprep.subr.bf16.mxu0 0
    %1821 = vmatpush1.bf16.msra.mxu0 0
    %1822 = vmatprep.subr.bf16.mxu0 0
    %1823 = vmatpush1.bf16.msra.mxu0 0
    %1824 = vmatprep.subr.bf16.mxu0 0
    %1825 = vmatpush1.bf16.msra.mxu0 0
    %1826 = vmatprep.subr.bf16.mxu0 0
    %1827 = vmatpush1.bf16.msra.mxu0 0
    %1828 = vmatprep.subr.bf16.mxu0 0
    %1829 = vmatpush1.bf16.msra.mxu0 0
    %1830 = vmatprep.subr.bf16.mxu0 0
    %1831 = vmatpush1.bf16.msra.mxu0 0
    %1832 = vmatprep.subr.bf16.mxu0 0
    %1833 = vmatpush1.bf16.msra.mxu0 0
    %1834 = vmatprep.subr.bf16.mxu0 0
    %1835 = vmatpush1.bf16.msra.mxu0 0
    %1836 = vmatprep.mubr.bf16.mxu0 0
    %1837 = vmatmul.mubr.bf16.gmra.mrb[0].mxu0 %v1802
    %v1838 = vpop.f32.mrb[0].mxu0
    %v1839 = vadd.f32 %v1744, %v1838
    %v1840 = vpop.f32.mrb[0].mxu0
    %v1841 = vadd.f32 %v1748, %v1840
    %v1842 = vpop.f32.mrb[0].mxu0
    %v1843 = vpop.f32.mrb[0].mxu0
    %1844 = vdwg.mxu0
    %1845 = vmatprep.subr.bf16.mxu0 %v1788
    %1846 = vmatpush1.bf16.msra.mxu0 %v1787
    %1847 = vmatprep.subr.bf16.mxu0 %v1792
    %1848 = vmatpush1.bf16.msra.mxu0 %v1791
    %1849 = vmatprep.subr.bf16.mxu0 0
    %1850 = vmatpush1.bf16.msra.mxu0 0
    %1851 = vmatprep.subr.bf16.mxu0 0
    %1852 = vmatpush1.bf16.msra.mxu0 0
    %1853 = vmatprep.subr.bf16.mxu0 0
    %1854 = vmatpush1.bf16.msra.mxu0 0
    %1855 = vmatprep.subr.bf16.mxu0 0
    %1856 = vmatpush1.bf16.msra.mxu0 0
    %1857 = vmatprep.subr.bf16.mxu0 0
    %1858 = vmatpush1.bf16.msra.mxu0 0
    %1859 = vmatprep.subr.bf16.mxu0 0
    %1860 = vmatpush1.bf16.msra.mxu0 0
    %1861 = vmatprep.subr.bf16.mxu0 0
    %1862 = vmatpush1.bf16.msra.mxu0 0
    %1863 = vmatprep.subr.bf16.mxu0 0
    %1864 = vmatpush1.bf16.msra.mxu0 0
    %1865 = vmatprep.subr.bf16.mxu0 0
    %1866 = vmatpush1.bf16.msra.mxu0 0
    %1867 = vmatprep.subr.bf16.mxu0 0
    %1868 = vmatpush1.bf16.msra.mxu0 0
    %1869 = vmatprep.subr.bf16.mxu0 0
    %1870 = vmatpush1.bf16.msra.mxu0 0
    %1871 = vmatprep.subr.bf16.mxu0 0
    %1872 = vmatpush1.bf16.msra.mxu0 0
    %1873 = vmatprep.subr.bf16.mxu0 0
    %1874 = vmatpush1.bf16.msra.mxu0 0
    %1875 = vmatprep.subr.bf16.mxu0 0
    %1876 = vmatpush1.bf16.msra.mxu0 0
    %1877 = vmatprep.mubr.bf16.mxu0 0
    %1878 = vmatmul.mubr.bf16.gmra.mrb[0].mxu0 %v1802
    %v1879 = vpop.f32.mrb[0].mxu0
    %v1880 = vadd.f32 %v1752, %v1879
    %v1881 = vpop.f32.mrb[0].mxu0
    %v1882 = vadd.f32 %v1756, %v1881
    %v1883 = vpop.f32.mrb[0].mxu0
    %v1884 = vpop.f32.mrb[0].mxu0
    %1885 = vdwg.mxu0
    %v1886 = vmul.f32 %v1839, 0.5
    %v1887 = vmul.f32 %v1841, 0.5
    %v1888 = vmul.f32 %v1880, 0.5
    %v1889 = vmul.f32 %v1882, 0.5
    %v1890 = vmul.f32 %v1839, 0.044715
    %v1891 = vmul.f32 %v1841, 0.044715
    %v1892 = vmul.f32 %v1880, 0.044715
    %v1893 = vmul.f32 %v1882, 0.044715
    %v1894 = vmul.f32 %v1890, %v1839
    %v1895 = vmul.f32 %v1891, %v1841
    %v1896 = vmul.f32 %v1892, %v1880
    %v1897 = vmul.f32 %v1893, %v1882
    %v1898 = vmul.f32 %v1894, %v1839
    %v1899 = vmul.f32 %v1895, %v1841
    %v1900 = vmul.f32 %v1896, %v1880
    %v1901 = vmul.f32 %v1897, %v1882
    %v1902 = vadd.f32 %v1839, %v1898
    %v1903 = vadd.f32 %v1841, %v1899
    %v1904 = vadd.f32 %v1880, %v1900
    %v1905 = vadd.f32 %v1882, %v1901
    %v1906 = vmul.f32 %v1902, 0.7978846
    %v1907 = vmul.f32 %v1903, 0.7978846
    %v1908 = vmul.f32 %v1904, 0.7978846
    %v1909 = vmul.f32 %v1905, 0.7978846
    %v1910 = vtanh.pop %v1906
    %v1911 = vtanh.pop %v1907
    %v1912 = vtanh.pop %v1908
    %v1913 = vtanh.pop %v1909
    %v1914 = vadd.f32 %v1910, 1.0
    %v1915 = vadd.f32 %v1911, 1.0
    %v1916 = vadd.f32 %v1912, 1.0
    %v1917 = vadd.f32 %v1913, 1.0
    %v1918 = vmul.f32 %v1886, %v1914
    %v1919 = vmul.f32 %v1887, %v1915
    %v1920 = vmul.f32 %v1888, %v1916
    %v1921 = vmul.f32 %v1889, %v1917
    %v1922 = vpack.c.bf16 %v1918, %v1918
    %v1923 = vpack.c.bf16 %v1919, %v1919
    %v1924 = vpack.c.bf16 %v1920, %v1920
    %v1925 = vpack.c.bf16 %v1921, %v1921
    %s1926 = scalar_lea.vmem %s9, 512
    %v1927 = vld [vmem:[%s1926] sm:$0xf]
    %v1928 = vld [vmem:[%s1926 + $0x4] sm:$0xf]
    %v1929 = vld [vmem:[%s1926 + $0x8] sm:$0xf]
    %v1930 = vld [vmem:[%s1926 + $0xc] sm:$0xf]
    %v1931 = vld [vmem:[%s1926 + $0x10] sm:$0xf]
    %v1932 = vld [vmem:[%s1926 + $0x14] sm:$0xf]
    %v1933 = vld [vmem:[%s1926 + $0x18] sm:$0xf]
    %v1934 = vld [vmem:[%s1926 + $0x1c] sm:$0xf]
    %v1935 = vld [vmem:[%s1926 + $0x20] sm:$0xf]
    %v1936 = vld [vmem:[%s1926 + $0x24] sm:$0xf]
    %v1937 = vld [vmem:[%s1926 + $0x28] sm:$0xf]
    %v1938 = vld [vmem:[%s1926 + $0x2c] sm:$0xf]
    %v1939 = vld [vmem:[%s1926 + $0x30] sm:$0xf]
    %v1940 = vld [vmem:[%s1926 + $0x34] sm:$0xf]
    %v1941 = vld [vmem:[%s1926 + $0x38] sm:$0xf]
    %v1942 = vld [vmem:[%s1926 + $0x3c] sm:$0xf]
    %v1943 = vld [vmem:[%s1926 + $0x40] sm:$0xf]
    %v1944 = vld [vmem:[%s1926 + $0x44] sm:$0xf]
    %v1945 = vld [vmem:[%s1926 + $0x48] sm:$0xf]
    %v1946 = vld [vmem:[%s1926 + $0x4c] sm:$0xf]
    %v1947 = vld [vmem:[%s1926 + $0x50] sm:$0xf]
    %v1948 = vld [vmem:[%s1926 + $0x54] sm:$0xf]
    %v1949 = vld [vmem:[%s1926 + $0x58] sm:$0xf]
    %v1950 = vld [vmem:[%s1926 + $0x5c] sm:$0xf]
    %v1951 = vld [vmem:[%s1926 + $0x60] sm:$0xf]
    %v1952 = vld [vmem:[%s1926 + $0x64] sm:$0xf]
    %v1953 = vld [vmem:[%s1926 + $0x68] sm:$0xf]
    %v1954 = vld [vmem:[%s1926 + $0x6c] sm:$0xf]
    %v1955 = vld [vmem:[%s1926 + $0x70] sm:$0xf]
    %v1956 = vld [vmem:[%s1926 + $0x74] sm:$0xf]
    %v1957 = vld [vmem:[%s1926 + $0x78] sm:$0xf]
    %v1958 = vld [vmem:[%s1926 + $0x7c] sm:$0xf]
    %v1959 = vld [vmem:[%s1926 + $0x80] sm:$0xf]
    %v1960 = vld [vmem:[%s1926 + $0x84] sm:$0xf]
    %v1961 = vld [vmem:[%s1926 + $0x88] sm:$0xf]
    %v1962 = vld [vmem:[%s1926 + $0x8c] sm:$0xf]
    %v1963 = vld [vmem:[%s1926 + $0x90] sm:$0xf]
    %v1964 = vld [vmem:[%s1926 + $0x94] sm:$0xf]
    %v1965 = vld [vmem:[%s1926 + $0x98] sm:$0xf]
    %v1966 = vld [vmem:[%s1926 + $0x9c] sm:$0xf]
    %v1967 = vld [vmem:[%s1926 + $0xa0] sm:$0xf]
    %v1968 = vld [vmem:[%s1926 + $0xa4] sm:$0xf]
    %v1969 = vld [vmem:[%s1926 + $0xa8] sm:$0xf]
    %v1970 = vld [vmem:[%s1926 + $0xac] sm:$0xf]
    %v1971 = vld [vmem:[%s1926 + $0xb0] sm:$0xf]
    %v1972 = vld [vmem:[%s1926 + $0xb4] sm:$0xf]
    %v1973 = vld [vmem:[%s1926 + $0xb8] sm:$0xf]
    %v1974 = vld [vmem:[%s1926 + $0xbc] sm:$0xf]
    %v1975 = vld [vmem:[%s1926 + $0xc0] sm:$0xf]
    %v1976 = vld [vmem:[%s1926 + $0xc4] sm:$0xf]
    %v1977 = vld [vmem:[%s1926 + $0xc8] sm:$0xf]
    %v1978 = vld [vmem:[%s1926 + $0xcc] sm:$0xf]
    %v1979 = vld [vmem:[%s1926 + $0xd0] sm:$0xf]
    %v1980 = vld [vmem:[%s1926 + $0xd4] sm:$0xf]
    %v1981 = vld [vmem:[%s1926 + $0xd8] sm:$0xf]
    %v1982 = vld [vmem:[%s1926 + $0xdc] sm:$0xf]
    %v1983 = vld [vmem:[%s1926 + $0xe0] sm:$0xf]
    %v1984 = vld [vmem:[%s1926 + $0xe4] sm:$0xf]
    %v1985 = vld [vmem:[%s1926 + $0xe8] sm:$0xf]
    %v1986 = vld [vmem:[%s1926 + $0xec] sm:$0xf]
    %v1987 = vld [vmem:[%s1926 + $0xf0] sm:$0xf]
    %v1988 = vld [vmem:[%s1926 + $0xf4] sm:$0xf]
    %v1989 = vld [vmem:[%s1926 + $0xf8] sm:$0xf]
    %v1990 = vld [vmem:[%s1926 + $0xfc] sm:$0xf]
    %v1991 = vld [vmem:[%s10 + $0x2] sm:$0x1]
    %v1992 = vlaneseq
    %v1993 = vshrl.u32 %v1992, 7
    %v1994 = vsub.s32 0, %v1993
    %v1995 = vrot.slane %v1991, %v1994
    %v2060 = vunpack.c.l.b16 %v1927
    %v2061 = vunpack.c.l.b16 %v1928
    %v2062 = vunpack.c.l.b16 %v1929
    %v2063 = vunpack.c.l.b16 %v1930
    %v2064 = vunpack.c.l.b16 %v1931
    %v2065 = vunpack.c.l.b16 %v1932
    %v2066 = vunpack.c.l.b16 %v1933
    %v2067 = vunpack.c.l.b16 %v1934
    %v2068 = vunpack.c.l.b16 %v1935
    %v2069 = vunpack.c.l.b16 %v1936
    %v2070 = vunpack.c.l.b16 %v1937
    %v2071 = vunpack.c.l.b16 %v1938
    %v2072 = vunpack.c.l.b16 %v1939
    %v2073 = vunpack.c.l.b16 %v1940
    %v2074 = vunpack.c.l.b16 %v1941
    %v2075 = vunpack.c.l.b16 %v1942
    %v2076 = vunpack.c.l.b16 %v1943
    %v2077 = vunpack.c.l.b16 %v1944
    %v2078 = vunpack.c.l.b16 %v1945
    %v2079 = vunpack.c.l.b16 %v1946
    %v2080 = vunpack.c.l.b16 %v1947
    %v2081 = vunpack.c.l.b16 %v1948
    %v2082 = vunpack.c.l.b16 %v1949
    %v2083 = vunpack.c.l.b16 %v1950
    %v2084 = vunpack.c.l.b16 %v1951
    %v2085 = vunpack.c.l.b16 %v1952
    %v2086 = vunpack.c.l.b16 %v1953
    %v2087 = vunpack.c.l.b16 %v1954
    %v2088 = vunpack.c.l.b16 %v1955
    %v2089 = vunpack.c.l.b16 %v1956
    %v2090 = vunpack.c.l.b16 %v1957
    %v2091 = vunpack.c.l.b16 %v1958
    %v2092 = vunpack.c.l.b16 %v1959
    %v2093 = vunpack.c.l.b16 %v1960
    %v2094 = vunpack.c.l.b16 %v1961
    %v2095 = vunpack.c.l.b16 %v1962
    %v2096 = vunpack.c.l.b16 %v1963
    %v2097 = vunpack.c.l.b16 %v1964
    %v2098 = vunpack.c.l.b16 %v1965
    %v2099 = vunpack.c.l.b16 %v1966
    %v2100 = vunpack.c.l.b16 %v1967
    %v2101 = vunpack.c.l.b16 %v1968
    %v2102 = vunpack.c.l.b16 %v1969
    %v2103 = vunpack.c.l.b16 %v1970
    %v2104 = vunpack.c.l.b16 %v1971
    %v2105 = vunpack.c.l.b16 %v1972
    %v2106 = vunpack.c.l.b16 %v1973
    %v2107 = vunpack.c.l.b16 %v1974
    %v2108 = vunpack.c.l.b16 %v1975
    %v2109 = vunpack.c.l.b16 %v1976
    %v2110 = vunpack.c.l.b16 %v1977
    %v2111 = vunpack.c.l.b16 %v1978
    %v2112 = vunpack.c.l.b16 %v1979
    %v2113 = vunpack.c.l.b16 %v1980
    %v2114 = vunpack.c.l.b16 %v1981
    %v2115 = vunpack.c.l.b16 %v1982
    %v2116 = vunpack.c.l.b16 %v1983
    %v2117 = vunpack.c.l.b16 %v1984
    %v2118 = vunpack.c.l.b16 %v1985
    %v2119 = vunpack.c.l.b16 %v1986
    %v2120 = vunpack.c.l.b16 %v1987
    %v2121 = vunpack.c.l.b16 %v1988
    %v2122 = vunpack.c.l.b16 %v1989
    %v2123 = vunpack.c.l.b16 %v1990
    %v2124 = vpack.c.b16 %v2061, %v2060
    %v2125 = vpack.c.b16 %v2063, %v2062
    %v2126 = vpack.c.b16 %v2065, %v2064
    %v2127 = vpack.c.b16 %v2067, %v2066
    %v2128 = vpack.c.b16 %v2069, %v2068
    %v2129 = vpack.c.b16 %v2071, %v2070
    %v2130 = vpack.c.b16 %v2073, %v2072
    %v2131 = vpack.c.b16 %v2075, %v2074
    %v2132 = vpack.c.b16 %v2077, %v2076
    %v2133 = vpack.c.b16 %v2079, %v2078
    %v2134 = vpack.c.b16 %v2081, %v2080
    %v2135 = vpack.c.b16 %v2083, %v2082
    %v2136 = vpack.c.b16 %v2085, %v2084
    %v2137 = vpack.c.b16 %v2087, %v2086
    %v2138 = vpack.c.b16 %v2089, %v2088
    %v2139 = vpack.c.b16 %v2091, %v2090
    %v2140 = vpack.c.b16 %v2093, %v2092
    %v2141 = vpack.c.b16 %v2095, %v2094
    %v2142 = vpack.c.b16 %v2097, %v2096
    %v2143 = vpack.c.b16 %v2099, %v2098
    %v2144 = vpack.c.b16 %v2101, %v2100
    %v2145 = vpack.c.b16 %v2103, %v2102
    %v2146 = vpack.c.b16 %v2105, %v2104
    %v2147 = vpack.c.b16 %v2107, %v2106
    %v2148 = vpack.c.b16 %v2109, %v2108
    %v2149 = vpack.c.b16 %v2111, %v2110
    %v2150 = vpack.c.b16 %v2113, %v2112
    %v2151 = vpack.c.b16 %v2115, %v2114
    %v2152 = vpack.c.b16 %v2117, %v2116
    %v2153 = vpack.c.b16 %v2119, %v2118
    %v2154 = vpack.c.b16 %v2121, %v2120
    %v2155 = vpack.c.b16 %v2123, %v2122
    %2188 = vmatprep.subr.bf16.mxu0 0
    %2189 = vmatpush1.bf16.msra.mxu0 %v2124
    %2190 = vmatprep.subr.bf16.mxu0 0
    %2191 = vmatpush1.bf16.msra.mxu0 %v2125
    %2192 = vmatprep.subr.bf16.mxu0 0
    %2193 = vmatpush1.bf16.msra.mxu0 %v2126
    %2194 = vmatprep.subr.bf16.mxu0 0
    %2195 = vmatpush1.bf16.msra.mxu0 %v2127
    %2196 = vmatprep.subr.bf16.mxu0 0
    %2197 = vmatpush1.bf16.msra.mxu0 %v2128
    %2198 = vmatprep.subr.bf16.mxu0 0
    %2199 = vmatpush1.bf16.msra.mxu0 %v2129
    %2200 = vmatprep.subr.bf16.mxu0 0
    %2201 = vmatpush1.bf16.msra.mxu0 %v2130
    %2202 = vmatprep.subr.bf16.mxu0 0
    %2203 = vmatpush1.bf16.msra.mxu0 %v2131
    %2204 = vmatprep.subr.bf16.mxu0 0
    %2205 = vmatpush1.bf16.msra.mxu0 %v2132
    %2206 = vmatprep.subr.bf16.mxu0 0
    %2207 = vmatpush1.bf16.msra.mxu0 %v2133
    %2208 = vmatprep.subr.bf16.mxu0 0
    %2209 = vmatpush1.bf16.msra.mxu0 %v2134
    %2210 = vmatprep.subr.bf16.mxu0 0
    %2211 = vmatpush1.bf16.msra.mxu0 %v2135
    %2212 = vmatprep.subr.bf16.mxu0 0
    %2213 = vmatpush1.bf16.msra.mxu0 %v2136
    %2214 = vmatprep.subr.bf16.mxu0 0
    %2215 = vmatpush1.bf16.msra.mxu0 %v2137
    %2216 = vmatprep.subr.bf16.mxu0 0
    %2217 = vmatpush1.bf16.msra.mxu0 %v2138
    %2218 = vmatprep.subr.bf16.mxu0 0
    %2219 = vmatpush1.bf16.msra.mxu0 %v2139
    %2220 = vmatprep.mubr.bf16.mxu0 %v1923
    %2221 = vmatmul.mubr.bf16.gmra.mrb[0].mxu0 %v1922
    %v2222 = vpop.f32.mrb[0].mxu0
    %v2223 = vadd.f32 %v1995, %v2222
    %v2224 = vpop.f32.mrb[0].mxu0
    %v2225 = vpop.f32.mrb[0].mxu0
    %v2226 = vpop.f32.mrb[0].mxu0
    %2227 = vdwg.mxu0
    %2228 = vmatprep.subr.bf16.mxu0 0
    %2229 = vmatpush1.bf16.msra.mxu0 %v2140
    %2230 = vmatprep.subr.bf16.mxu0 0
    %2231 = vmatpush1.bf16.msra.mxu0 %v2141
    %2232 = vmatprep.subr.bf16.mxu0 0
    %2233 = vmatpush1.bf16.msra.mxu0 %v2142
    %2234 = vmatprep.subr.bf16.mxu0 0
    %2235 = vmatpush1.bf16.msra.mxu0 %v2143
    %2236 = vmatprep.subr.bf16.mxu0 0
    %2237 = vmatpush1.bf16.msra.mxu0 %v2144
    %2238 = vmatprep.subr.bf16.mxu0 0
    %2239 = vmatpush1.bf16.msra.mxu0 %v2145
    %2240 = vmatprep.subr.bf16.mxu0 0
    %2241 = vmatpush1.bf16.msra.mxu0 %v2146
    %2242 = vmatprep.subr.bf16.mxu0 0
    %2243 = vmatpush1.bf16.msra.mxu0 %v2147
    %2244 = vmatprep.subr.bf16.mxu0 0
    %2245 = vmatpush1.bf16.msra.mxu0 %v2148
    %2246 = vmatprep.subr.bf16.mxu0 0
    %2247 = vmatpush1.bf16.msra.mxu0 %v2149
    %2248 = vmatprep.subr.bf16.mxu0 0
    %2249 = vmatpush1.bf16.msra.mxu0 %v2150
    %2250 = vmatprep.subr.bf16.mxu0 0
    %2251 = vmatpush1.bf16.msra.mxu0 %v2151
    %2252 = vmatprep.subr.bf16.mxu0 0
    %2253 = vmatpush1.bf16.msra.mxu0 %v2152
    %2254 = vmatprep.subr.bf16.mxu0 0
    %2255 = vmatpush1.bf16.msra.mxu0 %v2153
    %2256 = vmatprep.subr.bf16.mxu0 0
    %2257 = vmatpush1.bf16.msra.mxu0 %v2154
    %2258 = vmatprep.subr.bf16.mxu0 0
    %2259 = vmatpush1.bf16.msra.mxu0 %v2155
    %2260 = vmatprep.mubr.bf16.mxu0 %v1925
    %2261 = vmatmul.mubr.bf16.gmra.mrb[0].mxu0 %v1924
    %v2262 = vpop.f32.mrb[0].mxu0
    %v2263 = vadd.f32 %v2223, %v2262
    %v2264 = vpop.f32.mrb[0].mxu0
    %v2265 = vpop.f32.mrb[0].mxu0
    %v2266 = vpop.f32.mrb[0].mxu0
    %2267 = vdwg.mxu0
    %v2268 = vadd.f32 %v1727, %v2263
    %v2269 = vld [vmem:[%s13 + $0x2] sm:$0x1]
    %v2270 = vld [vmem:[%s14 + $0x2] sm:$0x1]
    %v2271 = vsel %vm147, %v2268, 0.0
    %2272 = vadd.xlane.f32.xlu0 %v2271
    %v2273 = vpop.xlane.xlu0 %2272
    %v2274 = vmul.f32 %v2273, %v262
    %v2275 = vsub.f32 %v2268, %v2274
    %v2276 = vmul.f32 %v2275, %v2275
    %v2277 = vsel %vm147, %v2276, 0.0
    %2278 = vadd.xlane.f32.xlu0 %v2277
    %v2279 = vpop.xlane.xlu0 %2278
    %v2280 = vmul.f32 %v2279, %v262
    %v2281 = vadd.f32 %v2280, 1e-05
    %v2282 = vrsqrt.pop %v2281
    %v2283 = vmul.f32 %v2275, %v2282
    %v2284 = vlaneseq
    %v2285 = vshrl.u32 %v2284, 7
    %v2286 = vsub.s32 0, %v2285
    %v2287 = vrot.slane %v2269, %v2286
    %v2288 = vmul.f32 %v2283, %v2287
    %v2289 = vlaneseq
    %v2290 = vshrl.u32 %v2289, 7
    %v2291 = vsub.s32 0, %v2290
    %v2292 = vrot.slane %v2270, %v2291
    %v2293 = vadd.f32 %v2288, %v2292
    %v2294 = vld [vmem:[%s15] sm:$0x1]
    %v2295 = vld [vmem:[%s16] sm:$0x1]
    %v2296 = vsel %vm147, %v2293, 0.0
    %2297 = vadd.xlane.f32.xlu0 %v2296
    %v2298 = vpop.xlane.xlu0 %2297
    %v2299 = vmul.f32 %v2298, %v262
    %v2300 = vsub.f32 %v2293, %v2299
    %v2301 = vmul.f32 %v2300, %v2300
    %v2302 = vsel %vm147, %v2301, 0.0
    %2303 = vadd.xlane.f32.xlu0 %v2302
    %v2304 = vpop.xlane.xlu0 %2303
    %v2305 = vmul.f32 %v2304, %v262
    %v2306 = vadd.f32 %v2305, 1e-05
    %v2307 = vrsqrt.pop %v2306
    %v2308 = vmul.f32 %v2300, %v2307
    %v2310 = vlaneseq
    %v2311 = vshrl.u32 %v2310, 7
    %v2312 = vsub.s32 0, %v2311
    %v2313 = vrot.slane %v2294, %v2312
    %v2315 = vmul.f32 %v2308, %v2313
    %v2317 = vlaneseq
    %v2318 = vshrl.u32 %v2317, 7
    %v2319 = vsub.s32 0, %v2318
    %v2320 = vrot.slane %v2295, %v2319
    %v2322 = vadd.f32 %v2315, %v2320
    %v2323 = vpack.c.bf16 %v2322, %v2322
    %v2324 = vld [vmem:[%s17] sm:$0xf]
    %v2325 = vld [vmem:[%s17 + $0x4] sm:$0xf]
    %v2326 = vld [vmem:[%s17 + $0x8] sm:$0xf]
    %v2327 = vld [vmem:[%s17 + $0xc] sm:$0xf]
    %v2328 = vld [vmem:[%s18] sm:$0x1]
    %v2330 = vlaneseq
    %v2331 = vshrl.u32 %v2330, 7
    %v2332 = vsub.s32 0, %v2331
    %v2333 = vrot.slane %v2328, %v2332
    %v2339 = vunpack.c.l.b16 %v2324
    %v2340 = vunpack.c.l.b16 %v2325
    %v2341 = vunpack.c.l.b16 %v2326
    %v2342 = vunpack.c.l.b16 %v2327
    %v2343 = vpack.c.b16 %v2340, %v2339
    %v2344 = vpack.c.b16 %v2342, %v2341
    %v2348 = vsel %vm147, %v2323, 0
    %2350 = vmatprep.subr.bf16.mxu0 0
    %2351 = vmatpush1.bf16.msra.mxu0 %v2343
    %2352 = vmatprep.subr.bf16.mxu0 0
    %2353 = vmatpush1.bf16.msra.mxu0 %v2344
    %2354 = vmatprep.subr.bf16.mxu0 0
    %2355 = vmatpush1.bf16.msra.mxu0 0
    %2356 = vmatprep.subr.bf16.mxu0 0
    %2357 = vmatpush1.bf16.msra.mxu0 0
    %2358 = vmatprep.subr.bf16.mxu0 0
    %2359 = vmatpush1.bf16.msra.mxu0 0
    %2360 = vmatprep.subr.bf16.mxu0 0
    %2361 = vmatpush1.bf16.msra.mxu0 0
    %2362 = vmatprep.subr.bf16.mxu0 0
    %2363 = vmatpush1.bf16.msra.mxu0 0
    %2364 = vmatprep.subr.bf16.mxu0 0
    %2365 = vmatpush1.bf16.msra.mxu0 0
    %2366 = vmatprep.subr.bf16.mxu0 0
    %2367 = vmatpush1.bf16.msra.mxu0 0
    %2368 = vmatprep.subr.bf16.mxu0 0
    %2369 = vmatpush1.bf16.msra.mxu0 0
    %2370 = vmatprep.subr.bf16.mxu0 0
    %2371 = vmatpush1.bf16.msra.mxu0 0
    %2372 = vmatprep.subr.bf16.mxu0 0
    %2373 = vmatpush1.bf16.msra.mxu0 0
    %2374 = vmatprep.subr.bf16.mxu0 0
    %2375 = vmatpush1.bf16.msra.mxu0 0
    %2376 = vmatprep.subr.bf16.mxu0 0
    %2377 = vmatpush1.bf16.msra.mxu0 0
    %2378 = vmatprep.subr.bf16.mxu0 0
    %2379 = vmatpush1.bf16.msra.mxu0 0
    %2380 = vmatprep.subr.bf16.mxu0 0
    %2381 = vmatpush1.bf16.msra.mxu0 0
    %2382 = vmatprep.mubr.bf16.mxu0 0
    %2383 = vmatmul.mubr.bf16.gmra.mrb[0].mxu0 %v2348
    %v2384 = vpop.f32.mrb[0].mxu0
    %v2385 = vadd.f32 %v2333, %v2384
    %v2386 = vpop.f32.mrb[0].mxu0
    %v2387 = vpop.f32.mrb[0].mxu0
    %v2388 = vpop.f32.mrb[0].mxu0
    %2389 = vdwg.mxu0
    %2390 = vst.msk [vmem:[#allocation2] sm:$0xff] %vm81, %v2385
    // Predicated region
    $region78: #{tpu_custom_call.1} parent=1 // pred_check
      _
    $region79: #{tpu_custom_call.1} parent=1 // pred_check_branch
      %2392 = sbr.rel (0) target = $region81
    $region80: #{tpu_custom_call.1} parent=1 // pred_region
      %s2394 = ssub.s32 128, 128
      %2395 = vsyncadd [#allocation3], %s2394
      %s2397 = sshll.u32 [#allocation2], 4
      %s2398 = int_to_ptr.vmem [resolvable:$true] %s2397
      %2400 = dma.vmem_to_hbm [thread:$0]  %s2398, 128, %s19, [#allocation3]
    $region81: #{tpu_custom_call.1} parent=1 // pred_fallthru
      _
    // Predicated region
    $region82: #{tpu_custom_call.1} parent=1 // pred_check
      _
    $region83: #{tpu_custom_call.1} parent=1 // pred_check_branch
      %2402 = sbr.rel (0) target = $region85
    $region84: #{tpu_custom_call.1} parent=1 // pred_region
      %2403 = dma.done [#allocation3], 128
    $region85: #{tpu_custom_call.1} parent=1 // pred_fallthru
      _
    %2404 = vsyncpa [#allocation3], 1

</llo_original>
